<compile_context>
chip_gen: v6e
topology: v6e:2x2x1
jax: 0.10.0
libtpu: 0.0.40
codegen_flags: <defaults>
</compile_context>

<pallas_src>
import jax
import jax.numpy as jnp
from jax.experimental import pallas as pl
from jax.experimental.pallas import tpu as pltpu

# ---------------- config (small, BERT-shaped) ----------------
VOCAB = 100
MAX_POS = 32
HIDDEN = 32
HEADS = 2
HEAD_DIM = HIDDEN // HEADS
INTER = 64
LAYERS = 12                 # -> 13 hidden states; hidden_states[9:] = last 4
POOL_START_LAYER = 8        # hidden_states[9] == output of layer index 8 (0-based)
N_POOL = LAYERS - POOL_START_LAYER   # = 4 selected hidden states
LN_EPS = 1e-12
BATCH = 2
SEQ = 8


# ---------------- fused encoder + pool kernel ----------------
def _ln(x, g, b):
    mu = jnp.mean(x, axis=-1, keepdims=True)
    xc = x - mu
    var = jnp.mean(xc * xc, axis=-1, keepdims=True)
    return xc * jax.lax.rsqrt(var + LN_EPS) * g + b


def _encoder_kernel(x0_ref, eg_ref, eb_ref, mb_ref,
                    wqkv_ref, bqkv_ref, wo_ref, bo_ref,
                    ln1g_ref, ln1b_ref, w1_ref, b1_ref,
                    w2_ref, b2_ref, ln2g_ref, ln2b_ref,
                    o_ref, x_vmem, ctx_vmem):
    layer = pl.program_id(0)

    # step 0: embedding LayerNorm once, keep activation resident in VMEM, zero pool acc.
    @pl.when(layer == 0)
    def _init():
        x_vmem[...] = _ln(x0_ref[...], eg_ref[...], eb_ref[...])
        o_ref[...] = jnp.zeros_like(o_ref)

    x = x_vmem[...]                                    # [B*S, H]
    mb = mb_ref[...]                                   # [B, S] additive mask bias

    # ---- fused QKV projection: one MXU matmul, N = 3H = 96 lanes ----
    qkv = jnp.dot(x, wqkv_ref[0], preferred_element_type=jnp.float32) + bqkv_ref[0]

    # ---- attention: all (batch, head) pairs in one kernel body, VMEM-resident ----
    scale = 1.0 / (HEAD_DIM ** 0.5)
    for b in range(BATCH):
        rows = slice(b * SEQ, (b + 1) * SEQ)
        bias = mb[b:b + 1, :]                          # [1, S]
        for h in range(HEADS):
            c0 = h * HEAD_DIM
            q = qkv[rows, c0:c0 + HEAD_DIM]                              # [S, Dh]
            k = qkv[rows, HIDDEN + c0:HIDDEN + c0 + HEAD_DIM]            # [S, Dh]
            v = qkv[rows, 2 * HIDDEN + c0:2 * HIDDEN + c0 + HEAD_DIM]    # [S, Dh]
            s = jax.lax.dot_general(
                q, k, (((1,), (1,)), ((), ())),
                preferred_element_type=jnp.float32) * scale + bias       # [S, S]
            m = jnp.max(s, axis=-1, keepdims=True)
            p = jnp.exp(s - m)
            p = p * pl.reciprocal(jnp.sum(p, axis=-1, keepdims=True), approx=True)
            ctx_vmem[rows, c0:c0 + HEAD_DIM] = jnp.dot(
                p, v, preferred_element_type=jnp.float32)

    # ---- attention output projection + residual + LN ----
    attn = jnp.dot(ctx_vmem[...], wo_ref[0],
                   preferred_element_type=jnp.float32) + bo_ref[0]
    x = _ln(x + attn, ln1g_ref[0], ln1b_ref[0])

    # ---- FFN + residual + LN ----
    h1 = jnp.dot(x, w1_ref[0], preferred_element_type=jnp.float32) + b1_ref[0]
    # TODO(synk): real BERT uses erf-GELU; tanh approximation used for robust Mosaic lowering.
    h1 = jax.nn.gelu(h1, approximate=True)
    ffn = jnp.dot(h1, w2_ref[0], preferred_element_type=jnp.float32) + b2_ref[0]
    x = _ln(x + ffn, ln2g_ref[0], ln2b_ref[0])

    x_vmem[...] = x                                    # carry to next layer

    # ---- running pool over hidden_states[9:]: layers 8..11 (0-based) ----
    @pl.when(layer >= POOL_START_LAYER)
    def _pool():
        sums = [jnp.sum(x[b * SEQ:(b + 1) * SEQ, :], axis=0, keepdims=True)
                for b in range(BATCH)]                 # each [1, H]
        o_ref[...] += jnp.concatenate(sums, axis=0)    # [B, H]

    @pl.when(layer == LAYERS - 1)
    def _final():
        o_ref[...] *= 1.0 / float(N_POOL * SEQ)


def encoder_pool(x0, mask_bias, p):
    """x0: [B*S, H] pre-LN embedding sum; mask_bias: [B, S]. Returns pooled [B, H]."""

    def full_spec(shape):
        return pl.BlockSpec(shape, lambda l, _n=len(shape): (0,) * _n)

    def per_layer_spec(shape2d):
        return pl.BlockSpec((1,) + shape2d, lambda l: (l, 0, 0))

    in_specs = [
        full_spec((BATCH * SEQ, HIDDEN)),          # x0
        full_spec((1, HIDDEN)),                    # emb_ln_g
        full_spec((1, HIDDEN)),                    # emb_ln_b
        full_spec((BATCH, SEQ)),                   # mask_bias
        per_layer_spec((HIDDEN, 3 * HIDDEN)),      # wqkv
        per_layer_spec((1, 3 * HIDDEN)),           # bqkv
        per_layer_spec((HIDDEN, HIDDEN)),          # wo
        per_layer_spec((1, HIDDEN)),               # bo
        per_layer_spec((1, HIDDEN)),               # ln1_g
        per_layer_spec((1, HIDDEN)),               # ln1_b
        per_layer_spec((HIDDEN, INTER)),           # w1
        per_layer_spec((1, INTER)),                # b1
        per_layer_spec((INTER, HIDDEN)),           # w2
        per_layer_spec((1, HIDDEN)),               # b2
        per_layer_spec((1, HIDDEN)),               # ln2_g
        per_layer_spec((1, HIDDEN)),               # ln2_b
    ]

    return pl.pallas_call(
        _encoder_kernel,
        out_shape=jax.ShapeDtypeStruct((BATCH, HIDDEN), jnp.float32),
        grid_spec=pltpu.PrefetchScalarGridSpec(
            num_scalar_prefetch=0,
            grid=(LAYERS,),
            in_specs=in_specs,
            out_specs=pl.BlockSpec((BATCH, HIDDEN), lambda l: (0, 0)),
            scratch_shapes=[
                pltpu.VMEM((BATCH * SEQ, HIDDEN), jnp.float32),   # carried activation
                pltpu.VMEM((BATCH * SEQ, HIDDEN), jnp.float32),   # attention context
            ]),
        compiler_params=pltpu.CompilerParams(
            dimension_semantics=("arbitrary",)),      # sequential: carries VMEM state
    )(x0, p["emb_ln_g"], p["emb_ln_b"], mask_bias,
      p["wqkv"], p["bqkv"], p["wo"], p["bo"],
      p["ln1_g"], p["ln1_b"], p["w1"], p["b1"],
      p["w2"], p["b2"], p["ln2_g"], p["ln2_b"])


# ---------------- synthetic BERT params (layer-stacked) ----------------
def init_params(key):
    ks = jax.random.split(key, 11)

    def nrm(k, shape):
        return jax.random.normal(k, shape, jnp.float32) * 0.02

    return {
        "word_emb": nrm(ks[0], (VOCAB, HIDDEN)),
        "pos_emb": nrm(ks[1], (MAX_POS, HIDDEN)),
        "type_emb": nrm(ks[2], (2, HIDDEN)),
        "emb_ln_g": jnp.ones((1, HIDDEN), jnp.float32),
        "emb_ln_b": jnp.zeros((1, HIDDEN), jnp.float32),
        # per-layer weights stacked on a leading layer axis (streamed by BlockSpec)
        "wqkv": nrm(ks[3], (LAYERS, HIDDEN, 3 * HIDDEN)),
        "bqkv": nrm(ks[4], (LAYERS, 1, 3 * HIDDEN)),
        "wo": nrm(ks[5], (LAYERS, HIDDEN, HIDDEN)),
        "bo": nrm(ks[6], (LAYERS, 1, HIDDEN)),
        "ln1_g": jnp.ones((LAYERS, 1, HIDDEN), jnp.float32),
        "ln1_b": jnp.zeros((LAYERS, 1, HIDDEN), jnp.float32),
        "w1": nrm(ks[7], (LAYERS, HIDDEN, INTER)),
        "b1": nrm(ks[8], (LAYERS, 1, INTER)),
        "w2": nrm(ks[9], (LAYERS, INTER, HIDDEN)),
        "b2": nrm(ks[10], (LAYERS, 1, HIDDEN)),
        "ln2_g": jnp.ones((LAYERS, 1, HIDDEN), jnp.float32),
        "ln2_b": jnp.zeros((LAYERS, 1, HIDDEN), jnp.float32),
    }


# ---------------- forward ----------------
def bert_embedding_forward(params, ids, mask):
    b, s = ids.shape
    # TODO(synk): embedding lookup is a gather; at real vocab sizes this would use a
    # scalar-prefetch-driven row-gather BlockSpec instead of plain-JAX indexing.
    we = params["word_emb"][ids]                       # [B, S, H]
    pe = params["pos_emb"][:s][None, :, :]             # [1, S, H]
    te = params["type_emb"][0][None, None, :]          # [1, 1, H] (token_type_ids = 0)
    x0 = (we + pe + te).reshape(b * s, HIDDEN)

    mask_bias = (1.0 - mask.astype(jnp.float32)) * -10000.0   # [B, S]
    return encoder_pool(x0, mask_bias, params)                # [B, H]


if __name__ == "__main__":
    key = jax.random.PRNGKey(0)
    k_par, k_ids = jax.random.split(key)
    params = init_params(k_par)

    ids = jax.random.randint(k_ids, (BATCH, SEQ), 0, VOCAB, dtype=jnp.int32)
    mask = jnp.array([[1, 1, 1, 1, 1, 1, 1, 1],
                      [1, 1, 1, 1, 1, 1, 0, 0]], dtype=jnp.int32)

    fwd = jax.jit(bert_embedding_forward)
    out = jax.block_until_ready(fwd(params, ids, mask))
    assert out.shape == (BATCH, HIDDEN) and out.dtype == jnp.float32
    print("KERNEL_OK")
</pallas_src>

<mosaic_0001>
module attributes {stable_mosaic.version = 11 : i64} {
  func.func @_encoder_kernel(%arg0: i32, %arg1: memref<16x32xf32, #tpu.memory_space<vmem>>, %arg2: memref<1x32xf32, #tpu.memory_space<vmem>>, %arg3: memref<1x32xf32, #tpu.memory_space<vmem>>, %arg4: memref<2x8xf32, #tpu.memory_space<vmem>>, %arg5: memref<1x32x96xf32, #tpu.memory_space<vmem>>, %arg6: memref<1x1x96xf32, #tpu.memory_space<vmem>>, %arg7: memref<1x32x32xf32, #tpu.memory_space<vmem>>, %arg8: memref<1x1x32xf32, #tpu.memory_space<vmem>>, %arg9: memref<1x1x32xf32, #tpu.memory_space<vmem>>, %arg10: memref<1x1x32xf32, #tpu.memory_space<vmem>>, %arg11: memref<1x32x64xf32, #tpu.memory_space<vmem>>, %arg12: memref<1x1x64xf32, #tpu.memory_space<vmem>>, %arg13: memref<1x64x32xf32, #tpu.memory_space<vmem>>, %arg14: memref<1x1x32xf32, #tpu.memory_space<vmem>>, %arg15: memref<1x1x32xf32, #tpu.memory_space<vmem>>, %arg16: memref<1x1x32xf32, #tpu.memory_space<vmem>>, %arg17: memref<2x32xf32, #tpu.memory_space<vmem>>, %arg18: memref<16x32xf32, #tpu.memory_space<vmem>>, %arg19: memref<16x32xf32, #tpu.memory_space<vmem>>) attributes {dimension_semantics = [#tpu.dimension_semantics<arbitrary>], iteration_bounds = array<i64: 12>, scalar_prefetch = 0 : i64, scratch_operands = 2 : i64, tpu.core_type = #tpu.core_type<tc>, window_params = [{pipeline_mode = #tpu.pipeline_mode<synchronous>, transform_indices = @transform_0, window_bounds = array<i64: 16, 32>}, {pipeline_mode = #tpu.pipeline_mode<synchronous>, transform_indices = @transform_1, window_bounds = array<i64: 1, 32>}, {pipeline_mode = #tpu.pipeline_mode<synchronous>, transform_indices = @transform_2, window_bounds = array<i64: 1, 32>}, {pipeline_mode = #tpu.pipeline_mode<synchronous>, transform_indices = @transform_3, window_bounds = array<i64: 2, 8>}, {transform_indices = @transform_4, window_bounds = array<i64: 1, 32, 96>}, {transform_indices = @transform_5, window_bounds = array<i64: 1, 1, 96>}, {transform_indices = @transform_6, window_bounds = array<i64: 1, 32, 32>}, {transform_indices = @transform_7, window_bounds = array<i64: 1, 1, 32>}, {transform_indices = @transform_8, window_bounds = array<i64: 1, 1, 32>}, {transform_indices = @transform_9, window_bounds = array<i64: 1, 1, 32>}, {transform_indices = @transform_10, window_bounds = array<i64: 1, 32, 64>}, {transform_indices = @transform_11, window_bounds = array<i64: 1, 1, 64>}, {transform_indices = @transform_12, window_bounds = array<i64: 1, 64, 32>}, {transform_indices = @transform_13, window_bounds = array<i64: 1, 1, 32>}, {transform_indices = @transform_14, window_bounds = array<i64: 1, 1, 32>}, {transform_indices = @transform_15, window_bounds = array<i64: 1, 1, 32>}, {pipeline_mode = #tpu.pipeline_mode<synchronous>, transform_indices = @transform_16, window_bounds = array<i64: 2, 32>}]} {
    %c0_i32 = arith.constant 0 : i32
    %0 = arith.cmpi eq, %arg0, %c0_i32 : i32
    %1 = arith.extui %0 : i1 to i32
    %c0_i32_0 = arith.constant 0 : i32
    %2 = arith.cmpi ne, %1, %c0_i32_0 : i32
    scf.if %2 {
      %c0_89 = arith.constant 0 : index
      %c0_90 = arith.constant 0 : index
      %186 = vector.load %arg1[%c0_89, %c0_90] : memref<16x32xf32, #tpu.memory_space<vmem>>, vector<16x32xf32>
      %c0_91 = arith.constant 0 : index
      %c0_92 = arith.constant 0 : index
      %187 = vector.load %arg2[%c0_91, %c0_92] : memref<1x32xf32, #tpu.memory_space<vmem>>, vector<1x32xf32>
      %c0_93 = arith.constant 0 : index
      %c0_94 = arith.constant 0 : index
      %188 = vector.load %arg3[%c0_93, %c0_94] : memref<1x32xf32, #tpu.memory_space<vmem>>, vector<1x32xf32>
      %cst_95 = arith.constant dense<0.000000e+00> : vector<16xf32>
      %189 = vector.multi_reduction <add>, %186, %cst_95 [1] : vector<16x32xf32> to vector<16xf32>
      %190 = vector.shape_cast %189 : vector<16xf32> to vector<16x1xf32>
      %cst_96 = arith.constant 3.200000e+01 : f32
      %191 = vector.broadcast %cst_96 : f32 to vector<16x1xf32>
      %192 = arith.divf %190, %191 : vector<16x1xf32>
      %193 = vector.broadcast %192 : vector<16x1xf32> to vector<16x32xf32>
      %194 = arith.subf %186, %193 : vector<16x32xf32>
      %195 = arith.mulf %194, %194 : vector<16x32xf32>
      %cst_97 = arith.constant dense<0.000000e+00> : vector<16xf32>
      %196 = vector.multi_reduction <add>, %195, %cst_97 [1] : vector<16x32xf32> to vector<16xf32>
      %197 = vector.shape_cast %196 : vector<16xf32> to vector<16x1xf32>
      %cst_98 = arith.constant 3.200000e+01 : f32
      %198 = vector.broadcast %cst_98 : f32 to vector<16x1xf32>
      %199 = arith.divf %197, %198 : vector<16x1xf32>
      %cst_99 = arith.constant 9.99999996E-13 : f32
      %200 = vector.broadcast %cst_99 : f32 to vector<16x1xf32>
      %201 = arith.addf %199, %200 : vector<16x1xf32>
      %202 = math.rsqrt %201 : vector<16x1xf32>
      %203 = vector.broadcast %202 : vector<16x1xf32> to vector<16x32xf32>
      %204 = arith.mulf %194, %203 : vector<16x32xf32>
      %205 = vector.broadcast %187 : vector<1x32xf32> to vector<16x32xf32>
      %206 = arith.mulf %204, %205 : vector<16x32xf32>
      %207 = vector.broadcast %188 : vector<1x32xf32> to vector<16x32xf32>
      %208 = arith.addf %206, %207 : vector<16x32xf32>
      %c0_100 = arith.constant 0 : index
      %c0_101 = arith.constant 0 : index
      %209 = vector.load %arg18[%c0_100, %c0_101] : memref<16x32xf32, #tpu.memory_space<vmem>>, vector<16x32xf32>
      tpu.vector_store %arg18[%c0_100, %c0_101], %208 {strides = array<i32>} : memref<16x32xf32, #tpu.memory_space<vmem>>, vector<16x32xf32>,
      %cst_102 = arith.constant 0.000000e+00 : f32
      %210 = vector.broadcast %cst_102 : f32 to vector<2x32xf32>
      %c0_103 = arith.constant 0 : index
      %c0_104 = arith.constant 0 : index
      %211 = vector.load %arg17[%c0_103, %c0_104] : memref<2x32xf32, #tpu.memory_space<vmem>>, vector<2x32xf32>
      tpu.vector_store %arg17[%c0_103, %c0_104], %210 {strides = array<i32>} : memref<2x32xf32, #tpu.memory_space<vmem>>, vector<2x32xf32>,
    } else {
    }
    %c0 = arith.constant 0 : index
    %c0_1 = arith.constant 0 : index
    %3 = vector.load %arg18[%c0, %c0_1] : memref<16x32xf32, #tpu.memory_space<vmem>>, vector<16x32xf32>
    %c0_2 = arith.constant 0 : index
    %c0_3 = arith.constant 0 : index
    %4 = vector.load %arg4[%c0_2, %c0_3] : memref<2x8xf32, #tpu.memory_space<vmem>>, vector<2x8xf32>
    %c0_4 = arith.constant 0 : index
    %c0_5 = arith.constant 0 : index
    %c0_6 = arith.constant 0 : index
    %5 = vector.load %arg5[%c0_4, %c0_5, %c0_6] : memref<1x32x96xf32, #tpu.memory_space<vmem>>, vector<1x32x96xf32>
    %6 = vector.shape_cast %5 : vector<1x32x96xf32> to vector<32x96xf32>
    %cst = arith.constant dense<0.000000e+00> : vector<16x96xf32>
    %7 = tpu.matmul %3, %6, %cst {dimension_numbers = #tpu.dot_dimension_numbers<[1], [0], [0], [1], [0, 0, 1, 1], [], []>} : vector<16x32xf32>, vector<32x96xf32>, vector<16x96xf32> -> vector<16x96xf32>
    %c0_7 = arith.constant 0 : index
    %c0_8 = arith.constant 0 : index
    %c0_9 = arith.constant 0 : index
    %8 = vector.load %arg6[%c0_7, %c0_8, %c0_9] : memref<1x1x96xf32, #tpu.memory_space<vmem>>, vector<1x1x96xf32>
    %9 = vector.shape_cast %8 : vector<1x1x96xf32> to vector<1x96xf32>
    %10 = vector.broadcast %9 : vector<1x96xf32> to vector<16x96xf32>
    %11 = arith.addf %7, %10 : vector<16x96xf32>
    %12 = vector.extract_strided_slice %4 {offsets = [0, 0], sizes = [1, 8], strides = [1, 1]} : vector<2x8xf32> to vector<1x8xf32>
    %13 = vector.extract_strided_slice %11 {offsets = [0, 0], sizes = [8, 16], strides = [1, 1]} : vector<16x96xf32> to vector<8x16xf32>
    %14 = vector.extract_strided_slice %11 {offsets = [0, 32], sizes = [8, 16], strides = [1, 1]} : vector<16x96xf32> to vector<8x16xf32>
    %15 = vector.extract_strided_slice %11 {offsets = [0, 64], sizes = [8, 16], strides = [1, 1]} : vector<16x96xf32> to vector<8x16xf32>
    %cst_10 = arith.constant dense<0.000000e+00> : vector<8x8xf32>
    %16 = tpu.matmul %13, %14, %cst_10 {dimension_numbers = #tpu.dot_dimension_numbers<[1], [1], [0], [0], [0, 0, 1, 0], [], []>} : vector<8x16xf32>, vector<8x16xf32>, vector<8x8xf32> -> vector<8x8xf32>
    %cst_11 = arith.constant 2.500000e-01 : f32
    %17 = vector.broadcast %cst_11 : f32 to vector<8x8xf32>
    %18 = arith.mulf %16, %17 : vector<8x8xf32>
    %19 = vector.broadcast %12 : vector<1x8xf32> to vector<8x8xf32>
    %20 = arith.addf %18, %19 : vector<8x8xf32>
    %cst_12 = arith.constant dense<0xFF800000> : vector<8xf32>
    %21 = vector.multi_reduction <maximumf>, %20, %cst_12 [1] : vector<8x8xf32> to vector<8xf32>
    %22 = vector.shape_cast %21 : vector<8xf32> to vector<8x1xf32>
    %23 = vector.broadcast %22 : vector<8x1xf32> to vector<8x8xf32>
    %24 = arith.subf %20, %23 : vector<8x8xf32>
    %25 = math.exp %24 : vector<8x8xf32>
    %cst_13 = arith.constant dense<0.000000e+00> : vector<8xf32>
    %26 = vector.multi_reduction <add>, %25, %cst_13 [1] : vector<8x8xf32> to vector<8xf32>
    %27 = vector.shape_cast %26 : vector<8xf32> to vector<8x1xf32>
    %28 = tpu.reciprocal %27 {approx = true} : vector<8x1xf32> -> vector<8x1xf32>
    %29 = vector.broadcast %28 : vector<8x1xf32> to vector<8x8xf32>
    %30 = arith.mulf %25, %29 : vector<8x8xf32>
    %cst_14 = arith.constant dense<0.000000e+00> : vector<8x16xf32>
    %31 = tpu.matmul %30, %15, %cst_14 {dimension_numbers = #tpu.dot_dimension_numbers<[1], [0], [0], [1], [0, 0, 1, 1], [], []>} : vector<8x8xf32>, vector<8x16xf32>, vector<8x16xf32> -> vector<8x16xf32>
    %c0_15 = arith.constant 0 : index
    %c0_16 = arith.constant 0 : index
    %32 = vector.load %arg19[%c0_15, %c0_16] : memref<16x32xf32, #tpu.memory_space<vmem>>, vector<8x16xf32>
    tpu.vector_store %arg19[%c0_15, %c0_16], %31 {strides = array<i32>} : memref<16x32xf32, #tpu.memory_space<vmem>>, vector<8x16xf32>,
    %33 = vector.extract_strided_slice %11 {offsets = [0, 16], sizes = [8, 16], strides = [1, 1]} : vector<16x96xf32> to vector<8x16xf32>
    %34 = vector.extract_strided_slice %11 {offsets = [0, 48], sizes = [8, 16], strides = [1, 1]} : vector<16x96xf32> to vector<8x16xf32>
    %35 = vector.extract_strided_slice %11 {offsets = [0, 80], sizes = [8, 16], strides = [1, 1]} : vector<16x96xf32> to vector<8x16xf32>
    %cst_17 = arith.constant dense<0.000000e+00> : vector<8x8xf32>
    %36 = tpu.matmul %33, %34, %cst_17 {dimension_numbers = #tpu.dot_dimension_numbers<[1], [1], [0], [0], [0, 0, 1, 0], [], []>} : vector<8x16xf32>, vector<8x16xf32>, vector<8x8xf32> -> vector<8x8xf32>
    %cst_18 = arith.constant 2.500000e-01 : f32
    %37 = vector.broadcast %cst_18 : f32 to vector<8x8xf32>
    %38 = arith.mulf %36, %37 : vector<8x8xf32>
    %39 = vector.broadcast %12 : vector<1x8xf32> to vector<8x8xf32>
    %40 = arith.addf %38, %39 : vector<8x8xf32>
    %cst_19 = arith.constant dense<0xFF800000> : vector<8xf32>
    %41 = vector.multi_reduction <maximumf>, %40, %cst_19 [1] : vector<8x8xf32> to vector<8xf32>
    %42 = vector.shape_cast %41 : vector<8xf32> to vector<8x1xf32>
    %43 = vector.broadcast %42 : vector<8x1xf32> to vector<8x8xf32>
    %44 = arith.subf %40, %43 : vector<8x8xf32>
    %45 = math.exp %44 : vector<8x8xf32>
    %cst_20 = arith.constant dense<0.000000e+00> : vector<8xf32>
    %46 = vector.multi_reduction <add>, %45, %cst_20 [1] : vector<8x8xf32> to vector<8xf32>
    %47 = vector.shape_cast %46 : vector<8xf32> to vector<8x1xf32>
    %48 = tpu.reciprocal %47 {approx = true} : vector<8x1xf32> -> vector<8x1xf32>
    %49 = vector.broadcast %48 : vector<8x1xf32> to vector<8x8xf32>
    %50 = arith.mulf %45, %49 : vector<8x8xf32>
    %cst_21 = arith.constant dense<0.000000e+00> : vector<8x16xf32>
    %51 = tpu.matmul %50, %35, %cst_21 {dimension_numbers = #tpu.dot_dimension_numbers<[1], [0], [0], [1], [0, 0, 1, 1], [], []>} : vector<8x8xf32>, vector<8x16xf32>, vector<8x16xf32> -> vector<8x16xf32>
    %c0_22 = arith.constant 0 : index
    %c16 = arith.constant 16 : index
    %52 = vector.load %arg19[%c0_22, %c16] : memref<16x32xf32, #tpu.memory_space<vmem>>, vector<8x16xf32>
    tpu.vector_store %arg19[%c0_22, %c16], %51 {strides = array<i32>} : memref<16x32xf32, #tpu.memory_space<vmem>>, vector<8x16xf32>,
    %53 = vector.extract_strided_slice %4 {offsets = [1, 0], sizes = [1, 8], strides = [1, 1]} : vector<2x8xf32> to vector<1x8xf32>
    %54 = vector.extract_strided_slice %11 {offsets = [8, 0], sizes = [8, 16], strides = [1, 1]} : vector<16x96xf32> to vector<8x16xf32>
    %55 = vector.extract_strided_slice %11 {offsets = [8, 32], sizes = [8, 16], strides = [1, 1]} : vector<16x96xf32> to vector<8x16xf32>
    %56 = vector.extract_strided_slice %11 {offsets = [8, 64], sizes = [8, 16], strides = [1, 1]} : vector<16x96xf32> to vector<8x16xf32>
    %cst_23 = arith.constant dense<0.000000e+00> : vector<8x8xf32>
    %57 = tpu.matmul %54, %55, %cst_23 {dimension_numbers = #tpu.dot_dimension_numbers<[1], [1], [0], [0], [0, 0, 1, 0], [], []>} : vector<8x16xf32>, vector<8x16xf32>, vector<8x8xf32> -> vector<8x8xf32>
    %cst_24 = arith.constant 2.500000e-01 : f32
    %58 = vector.broadcast %cst_24 : f32 to vector<8x8xf32>
    %59 = arith.mulf %57, %58 : vector<8x8xf32>
    %60 = vector.broadcast %53 : vector<1x8xf32> to vector<8x8xf32>
    %61 = arith.addf %59, %60 : vector<8x8xf32>
    %cst_25 = arith.constant dense<0xFF800000> : vector<8xf32>
    %62 = vector.multi_reduction <maximumf>, %61, %cst_25 [1] : vector<8x8xf32> to vector<8xf32>
    %63 = vector.shape_cast %62 : vector<8xf32> to vector<8x1xf32>
    %64 = vector.broadcast %63 : vector<8x1xf32> to vector<8x8xf32>
    %65 = arith.subf %61, %64 : vector<8x8xf32>
    %66 = math.exp %65 : vector<8x8xf32>
    %cst_26 = arith.constant dense<0.000000e+00> : vector<8xf32>
    %67 = vector.multi_reduction <add>, %66, %cst_26 [1] : vector<8x8xf32> to vector<8xf32>
    %68 = vector.shape_cast %67 : vector<8xf32> to vector<8x1xf32>
    %69 = tpu.reciprocal %68 {approx = true} : vector<8x1xf32> -> vector<8x1xf32>
    %70 = vector.broadcast %69 : vector<8x1xf32> to vector<8x8xf32>
    %71 = arith.mulf %66, %70 : vector<8x8xf32>
    %cst_27 = arith.constant dense<0.000000e+00> : vector<8x16xf32>
    %72 = tpu.matmul %71, %56, %cst_27 {dimension_numbers = #tpu.dot_dimension_numbers<[1], [0], [0], [1], [0, 0, 1, 1], [], []>} : vector<8x8xf32>, vector<8x16xf32>, vector<8x16xf32> -> vector<8x16xf32>
    %c8 = arith.constant 8 : index
    %c0_28 = arith.constant 0 : index
    %73 = vector.load %arg19[%c8, %c0_28] : memref<16x32xf32, #tpu.memory_space<vmem>>, vector<8x16xf32>
    tpu.vector_store %arg19[%c8, %c0_28], %72 {strides = array<i32>} : memref<16x32xf32, #tpu.memory_space<vmem>>, vector<8x16xf32>,
    %74 = vector.extract_strided_slice %11 {offsets = [8, 16], sizes = [8, 16], strides = [1, 1]} : vector<16x96xf32> to vector<8x16xf32>
    %75 = vector.extract_strided_slice %11 {offsets = [8, 48], sizes = [8, 16], strides = [1, 1]} : vector<16x96xf32> to vector<8x16xf32>
    %76 = vector.extract_strided_slice %11 {offsets = [8, 80], sizes = [8, 16], strides = [1, 1]} : vector<16x96xf32> to vector<8x16xf32>
    %cst_29 = arith.constant dense<0.000000e+00> : vector<8x8xf32>
    %77 = tpu.matmul %74, %75, %cst_29 {dimension_numbers = #tpu.dot_dimension_numbers<[1], [1], [0], [0], [0, 0, 1, 0], [], []>} : vector<8x16xf32>, vector<8x16xf32>, vector<8x8xf32> -> vector<8x8xf32>
    %cst_30 = arith.constant 2.500000e-01 : f32
    %78 = vector.broadcast %cst_30 : f32 to vector<8x8xf32>
    %79 = arith.mulf %77, %78 : vector<8x8xf32>
    %80 = vector.broadcast %53 : vector<1x8xf32> to vector<8x8xf32>
    %81 = arith.addf %79, %80 : vector<8x8xf32>
    %cst_31 = arith.constant dense<0xFF800000> : vector<8xf32>
    %82 = vector.multi_reduction <maximumf>, %81, %cst_31 [1] : vector<8x8xf32> to vector<8xf32>
    %83 = vector.shape_cast %82 : vector<8xf32> to vector<8x1xf32>
    %84 = vector.broadcast %83 : vector<8x1xf32> to vector<8x8xf32>
    %85 = arith.subf %81, %84 : vector<8x8xf32>
    %86 = math.exp %85 : vector<8x8xf32>
    %cst_32 = arith.constant dense<0.000000e+00> : vector<8xf32>
    %87 = vector.multi_reduction <add>, %86, %cst_32 [1] : vector<8x8xf32> to vector<8xf32>
    %88 = vector.shape_cast %87 : vector<8xf32> to vector<8x1xf32>
    %89 = tpu.reciprocal %88 {approx = true} : vector<8x1xf32> -> vector<8x1xf32>
    %90 = vector.broadcast %89 : vector<8x1xf32> to vector<8x8xf32>
    %91 = arith.mulf %86, %90 : vector<8x8xf32>
    %cst_33 = arith.constant dense<0.000000e+00> : vector<8x16xf32>
    %92 = tpu.matmul %91, %76, %cst_33 {dimension_numbers = #tpu.dot_dimension_numbers<[1], [0], [0], [1], [0, 0, 1, 1], [], []>} : vector<8x8xf32>, vector<8x16xf32>, vector<8x16xf32> -> vector<8x16xf32>
    %c8_34 = arith.constant 8 : index
    %c16_35 = arith.constant 16 : index
    %93 = vector.load %arg19[%c8_34, %c16_35] : memref<16x32xf32, #tpu.memory_space<vmem>>, vector<8x16xf32>
    tpu.vector_store %arg19[%c8_34, %c16_35], %92 {strides = array<i32>} : memref<16x32xf32, #tpu.memory_space<vmem>>, vector<8x16xf32>,
    %c0_36 = arith.constant 0 : index
    %c0_37 = arith.constant 0 : index
    %94 = vector.load %arg19[%c0_36, %c0_37] : memref<16x32xf32, #tpu.memory_space<vmem>>, vector<16x32xf32>
    %c0_38 = arith.constant 0 : index
    %c0_39 = arith.constant 0 : index
    %c0_40 = arith.constant 0 : index
    %95 = vector.load %arg7[%c0_38, %c0_39, %c0_40] : memref<1x32x32xf32, #tpu.memory_space<vmem>>, vector<1x32x32xf32>
    %96 = vector.shape_cast %95 : vector<1x32x32xf32> to vector<32x32xf32>
    %cst_41 = arith.constant dense<0.000000e+00> : vector<16x32xf32>
    %97 = tpu.matmul %94, %96, %cst_41 {dimension_numbers = #tpu.dot_dimension_numbers<[1], [0], [0], [1], [0, 0, 1, 1], [], []>} : vector<16x32xf32>, vector<32x32xf32>, vector<16x32xf32> -> vector<16x32xf32>
    %c0_42 = arith.constant 0 : index
    %c0_43 = arith.constant 0 : index
    %c0_44 = arith.constant 0 : index
    %98 = vector.load %arg8[%c0_42, %c0_43, %c0_44] : memref<1x1x32xf32, #tpu.memory_space<vmem>>, vector<1x1x32xf32>
    %99 = vector.shape_cast %98 : vector<1x1x32xf32> to vector<1x32xf32>
    %100 = vector.broadcast %99 : vector<1x32xf32> to vector<16x32xf32>
    %101 = arith.addf %97, %100 : vector<16x32xf32>
    %102 = arith.addf %3, %101 : vector<16x32xf32>
    %c0_45 = arith.constant 0 : index
    %c0_46 = arith.constant 0 : index
    %c0_47 = arith.constant 0 : index
    %103 = vector.load %arg9[%c0_45, %c0_46, %c0_47] : memref<1x1x32xf32, #tpu.memory_space<vmem>>, vector<1x1x32xf32>
    %104 = vector.shape_cast %103 : vector<1x1x32xf32> to vector<1x32xf32>
    %c0_48 = arith.constant 0 : index
    %c0_49 = arith.constant 0 : index
    %c0_50 = arith.constant 0 : index
    %105 = vector.load %arg10[%c0_48, %c0_49, %c0_50] : memref<1x1x32xf32, #tpu.memory_space<vmem>>, vector<1x1x32xf32>
    %106 = vector.shape_cast %105 : vector<1x1x32xf32> to vector<1x32xf32>
    %cst_51 = arith.constant dense<0.000000e+00> : vector<16xf32>
    %107 = vector.multi_reduction <add>, %102, %cst_51 [1] : vector<16x32xf32> to vector<16xf32>
    %108 = vector.shape_cast %107 : vector<16xf32> to vector<16x1xf32>
    %cst_52 = arith.constant 3.200000e+01 : f32
    %109 = vector.broadcast %cst_52 : f32 to vector<16x1xf32>
    %110 = arith.divf %108, %109 : vector<16x1xf32>
    %111 = vector.broadcast %110 : vector<16x1xf32> to vector<16x32xf32>
    %112 = arith.subf %102, %111 : vector<16x32xf32>
    %113 = arith.mulf %112, %112 : vector<16x32xf32>
    %cst_53 = arith.constant dense<0.000000e+00> : vector<16xf32>
    %114 = vector.multi_reduction <add>, %113, %cst_53 [1] : vector<16x32xf32> to vector<16xf32>
    %115 = vector.shape_cast %114 : vector<16xf32> to vector<16x1xf32>
    %cst_54 = arith.constant 3.200000e+01 : f32
    %116 = vector.broadcast %cst_54 : f32 to vector<16x1xf32>
    %117 = arith.divf %115, %116 : vector<16x1xf32>
    %cst_55 = arith.constant 9.99999996E-13 : f32
    %118 = vector.broadcast %cst_55 : f32 to vector<16x1xf32>
    %119 = arith.addf %117, %118 : vector<16x1xf32>
    %120 = math.rsqrt %119 : vector<16x1xf32>
    %121 = vector.broadcast %120 : vector<16x1xf32> to vector<16x32xf32>
    %122 = arith.mulf %112, %121 : vector<16x32xf32>
    %123 = vector.broadcast %104 : vector<1x32xf32> to vector<16x32xf32>
    %124 = arith.mulf %122, %123 : vector<16x32xf32>
    %125 = vector.broadcast %106 : vector<1x32xf32> to vector<16x32xf32>
    %126 = arith.addf %124, %125 : vector<16x32xf32>
    %c0_56 = arith.constant 0 : index
    %c0_57 = arith.constant 0 : index
    %c0_58 = arith.constant 0 : index
    %127 = vector.load %arg11[%c0_56, %c0_57, %c0_58] : memref<1x32x64xf32, #tpu.memory_space<vmem>>, vector<1x32x64xf32>
    %128 = vector.shape_cast %127 : vector<1x32x64xf32> to vector<32x64xf32>
    %cst_59 = arith.constant dense<0.000000e+00> : vector<16x64xf32>
    %129 = tpu.matmul %126, %128, %cst_59 {dimension_numbers = #tpu.dot_dimension_numbers<[1], [0], [0], [1], [0, 0, 1, 1], [], []>} : vector<16x32xf32>, vector<32x64xf32>, vector<16x64xf32> -> vector<16x64xf32>
    %c0_60 = arith.constant 0 : index
    %c0_61 = arith.constant 0 : index
    %c0_62 = arith.constant 0 : index
    %130 = vector.load %arg12[%c0_60, %c0_61, %c0_62] : memref<1x1x64xf32, #tpu.memory_space<vmem>>, vector<1x1x64xf32>
    %131 = vector.shape_cast %130 : vector<1x1x64xf32> to vector<1x64xf32>
    %132 = vector.broadcast %131 : vector<1x64xf32> to vector<16x64xf32>
    %133 = arith.addf %129, %132 : vector<16x64xf32>
    %134 = arith.mulf %133, %133 : vector<16x64xf32>
    %135 = arith.mulf %133, %134 : vector<16x64xf32>
    %cst_63 = arith.constant 4.471500e-02 : f32
    %136 = vector.broadcast %cst_63 : f32 to vector<16x64xf32>
    %137 = arith.mulf %136, %135 : vector<16x64xf32>
    %138 = arith.addf %133, %137 : vector<16x64xf32>
    %cst_64 = arith.constant 0.797884583 : f32
    %139 = vector.broadcast %cst_64 : f32 to vector<16x64xf32>
    %140 = arith.mulf %139, %138 : vector<16x64xf32>
    %141 = math.tanh %140 : vector<16x64xf32>
    %cst_65 = arith.constant 1.000000e+00 : f32
    %142 = vector.broadcast %cst_65 : f32 to vector<16x64xf32>
    %143 = arith.addf %142, %141 : vector<16x64xf32>
    %cst_66 = arith.constant 5.000000e-01 : f32
    %144 = vector.broadcast %cst_66 : f32 to vector<16x64xf32>
    %145 = arith.mulf %144, %143 : vector<16x64xf32>
    %146 = arith.mulf %133, %145 : vector<16x64xf32>
    %c0_67 = arith.constant 0 : index
    %c0_68 = arith.constant 0 : index
    %c0_69 = arith.constant 0 : index
    %147 = vector.load %arg13[%c0_67, %c0_68, %c0_69] : memref<1x64x32xf32, #tpu.memory_space<vmem>>, vector<1x64x32xf32>
    %148 = vector.shape_cast %147 : vector<1x64x32xf32> to vector<64x32xf32>
    %cst_70 = arith.constant dense<0.000000e+00> : vector<16x32xf32>
    %149 = tpu.matmul %146, %148, %cst_70 {dimension_numbers = #tpu.dot_dimension_numbers<[1], [0], [0], [1], [0, 0, 1, 1], [], []>} : vector<16x64xf32>, vector<64x32xf32>, vector<16x32xf32> -> vector<16x32xf32>
    %c0_71 = arith.constant 0 : index
    %c0_72 = arith.constant 0 : index
    %c0_73 = arith.constant 0 : index
    %150 = vector.load %arg14[%c0_71, %c0_72, %c0_73] : memref<1x1x32xf32, #tpu.memory_space<vmem>>, vector<1x1x32xf32>
    %151 = vector.shape_cast %150 : vector<1x1x32xf32> to vector<1x32xf32>
    %152 = vector.broadcast %151 : vector<1x32xf32> to vector<16x32xf32>
    %153 = arith.addf %149, %152 : vector<16x32xf32>
    %154 = arith.addf %126, %153 : vector<16x32xf32>
    %c0_74 = arith.constant 0 : index
    %c0_75 = arith.constant 0 : index
    %c0_76 = arith.constant 0 : index
    %155 = vector.load %arg15[%c0_74, %c0_75, %c0_76] : memref<1x1x32xf32, #tpu.memory_space<vmem>>, vector<1x1x32xf32>
    %156 = vector.shape_cast %155 : vector<1x1x32xf32> to vector<1x32xf32>
    %c0_77 = arith.constant 0 : index
    %c0_78 = arith.constant 0 : index
    %c0_79 = arith.constant 0 : index
    %157 = vector.load %arg16[%c0_77, %c0_78, %c0_79] : memref<1x1x32xf32, #tpu.memory_space<vmem>>, vector<1x1x32xf32>
    %158 = vector.shape_cast %157 : vector<1x1x32xf32> to vector<1x32xf32>
    %cst_80 = arith.constant dense<0.000000e+00> : vector<16xf32>
    %159 = vector.multi_reduction <add>, %154, %cst_80 [1] : vector<16x32xf32> to vector<16xf32>
    %160 = vector.shape_cast %159 : vector<16xf32> to vector<16x1xf32>
    %cst_81 = arith.constant 3.200000e+01 : f32
    %161 = vector.broadcast %cst_81 : f32 to vector<16x1xf32>
    %162 = arith.divf %160, %161 : vector<16x1xf32>
    %163 = vector.broadcast %162 : vector<16x1xf32> to vector<16x32xf32>
    %164 = arith.subf %154, %163 : vector<16x32xf32>
    %165 = arith.mulf %164, %164 : vector<16x32xf32>
    %cst_82 = arith.constant dense<0.000000e+00> : vector<16xf32>
    %166 = vector.multi_reduction <add>, %165, %cst_82 [1] : vector<16x32xf32> to vector<16xf32>
    %167 = vector.shape_cast %166 : vector<16xf32> to vector<16x1xf32>
    %cst_83 = arith.constant 3.200000e+01 : f32
    %168 = vector.broadcast %cst_83 : f32 to vector<16x1xf32>
    %169 = arith.divf %167, %168 : vector<16x1xf32>
    %cst_84 = arith.constant 9.99999996E-13 : f32
    %170 = vector.broadcast %cst_84 : f32 to vector<16x1xf32>
    %171 = arith.addf %169, %170 : vector<16x1xf32>
    %172 = math.rsqrt %171 : vector<16x1xf32>
    %173 = vector.broadcast %172 : vector<16x1xf32> to vector<16x32xf32>
    %174 = arith.mulf %164, %173 : vector<16x32xf32>
    %175 = vector.broadcast %156 : vector<1x32xf32> to vector<16x32xf32>
    %176 = arith.mulf %174, %175 : vector<16x32xf32>
    %177 = vector.broadcast %158 : vector<1x32xf32> to vector<16x32xf32>
    %178 = arith.addf %176, %177 : vector<16x32xf32>
    %c0_85 = arith.constant 0 : index
    %c0_86 = arith.constant 0 : index
    %179 = vector.load %arg18[%c0_85, %c0_86] : memref<16x32xf32, #tpu.memory_space<vmem>>, vector<16x32xf32>
    tpu.vector_store %arg18[%c0_85, %c0_86], %178 {strides = array<i32>} : memref<16x32xf32, #tpu.memory_space<vmem>>, vector<16x32xf32>,
    %c8_i32 = arith.constant 8 : i32
    %180 = arith.cmpi sge, %arg0, %c8_i32 : i32
    %181 = arith.extui %180 : i1 to i32
    %c0_i32_87 = arith.constant 0 : i32
    %182 = arith.cmpi ne, %181, %c0_i32_87 : i32
    scf.if %182 {
      %186 = vector.extract_strided_slice %178 {offsets = [0, 0], sizes = [8, 32], strides = [1, 1]} : vector<16x32xf32> to vector<8x32xf32>
      %cst_89 = arith.constant dense<0.000000e+00> : vector<32xf32>
      %187 = vector.multi_reduction <add>, %186, %cst_89 [0] : vector<8x32xf32> to vector<32xf32>
      %188 = vector.shape_cast %187 : vector<32xf32> to vector<1x32xf32>
      %189 = vector.extract_strided_slice %178 {offsets = [8, 0], sizes = [8, 32], strides = [1, 1]} : vector<16x32xf32> to vector<8x32xf32>
      %cst_90 = arith.constant dense<0.000000e+00> : vector<32xf32>
      %190 = vector.multi_reduction <add>, %189, %cst_90 [0] : vector<8x32xf32> to vector<32xf32>
      %191 = vector.shape_cast %190 : vector<32xf32> to vector<1x32xf32>
      %c0_91 = arith.constant 0 : index
      %c0_92 = arith.constant 0 : index
      %192 = vector.load %arg17[%c0_91, %c0_92] : memref<2x32xf32, #tpu.memory_space<vmem>>, vector<2x32xf32>
      %193 = tpu.concatenate %188, %191 in 0 : vector<1x32xf32>, vector<1x32xf32> -> vector<2x32xf32>
      %194 = arith.addf %192, %193 : vector<2x32xf32>
      %c0_93 = arith.constant 0 : index
      %c0_94 = arith.constant 0 : index
      %195 = vector.load %arg17[%c0_93, %c0_94] : memref<2x32xf32, #tpu.memory_space<vmem>>, vector<2x32xf32>
      tpu.vector_store %arg17[%c0_93, %c0_94], %194 {strides = array<i32>} : memref<2x32xf32, #tpu.memory_space<vmem>>, vector<2x32xf32>,
    } else {
    }
    %c11_i32 = arith.constant 11 : i32
    %183 = arith.cmpi eq, %arg0, %c11_i32 : i32
    %184 = arith.extui %183 : i1 to i32
    %c0_i32_88 = arith.constant 0 : i32
    %185 = arith.cmpi ne, %184, %c0_i32_88 : i32
    scf.if %185 {
      %c0_89 = arith.constant 0 : index
      %c0_90 = arith.constant 0 : index
      %186 = vector.load %arg17[%c0_89, %c0_90] : memref<2x32xf32, #tpu.memory_space<vmem>>, vector<2x32xf32>
      %cst_91 = arith.constant 3.125000e-02 : f32
      %187 = vector.broadcast %cst_91 : f32 to vector<2x32xf32>
      %188 = arith.mulf %186, %187 : vector<2x32xf32>
      %c0_92 = arith.constant 0 : index
      %c0_93 = arith.constant 0 : index
      %189 = vector.load %arg17[%c0_92, %c0_93] : memref<2x32xf32, #tpu.memory_space<vmem>>, vector<2x32xf32>
      tpu.vector_store %arg17[%c0_92, %c0_93], %188 {strides = array<i32>} : memref<2x32xf32, #tpu.memory_space<vmem>>, vector<2x32xf32>,
    } else {
    }
    return
  }
  func.func @transform_0(%arg0: i32) -> (i32, i32) {
    %c0_i32 = arith.constant 0 : i32
    %c0_i32_0 = arith.constant 0 : i32
    %c0_i32_1 = arith.constant 0 : i32
    return %c0_i32, %c0_i32_0 : i32, i32
  }
  func.func @transform_1(%arg0: i32) -> (i32, i32) {
    %c0_i32 = arith.constant 0 : i32
    %c0_i32_0 = arith.constant 0 : i32
    %c0_i32_1 = arith.constant 0 : i32
    return %c0_i32, %c0_i32_0 : i32, i32
  }
  func.func @transform_2(%arg0: i32) -> (i32, i32) {
    %c0_i32 = arith.constant 0 : i32
    %c0_i32_0 = arith.constant 0 : i32
    %c0_i32_1 = arith.constant 0 : i32
    return %c0_i32, %c0_i32_0 : i32, i32
  }
  func.func @transform_3(%arg0: i32) -> (i32, i32) {
    %c0_i32 = arith.constant 0 : i32
    %c0_i32_0 = arith.constant 0 : i32
    %c0_i32_1 = arith.constant 0 : i32
    return %c0_i32, %c0_i32_0 : i32, i32
  }
  func.func @transform_4(%arg0: i32) -> (i32, i32, i32) {
    %c0_i32 = arith.constant 0 : i32
    %c0_i32_0 = arith.constant 0 : i32
    %c0_i32_1 = arith.constant 0 : i32
    return %arg0, %c0_i32, %c0_i32_0 : i32, i32, i32
  }
  func.func @transform_5(%arg0: i32) -> (i32, i32, i32) {
    %c0_i32 = arith.constant 0 : i32
    %c0_i32_0 = arith.constant 0 : i32
    %c0_i32_1 = arith.constant 0 : i32
    return %arg0, %c0_i32, %c0_i32_0 : i32, i32, i32
  }
  func.func @transform_6(%arg0: i32) -> (i32, i32, i32) {
    %c0_i32 = arith.constant 0 : i32
    %c0_i32_0 = arith.constant 0 : i32
    %c0_i32_1 = arith.constant 0 : i32
    return %arg0, %c0_i32, %c0_i32_0 : i32, i32, i32
  }
  func.func @transform_7(%arg0: i32) -> (i32, i32, i32) {
    %c0_i32 = arith.constant 0 : i32
    %c0_i32_0 = arith.constant 0 : i32
    %c0_i32_1 = arith.constant 0 : i32
    return %arg0, %c0_i32, %c0_i32_0 : i32, i32, i32
  }
  func.func @transform_8(%arg0: i32) -> (i32, i32, i32) {
    %c0_i32 = arith.constant 0 : i32
    %c0_i32_0 = arith.constant 0 : i32
    %c0_i32_1 = arith.constant 0 : i32
    return %arg0, %c0_i32, %c0_i32_0 : i32, i32, i32
  }
  func.func @transform_9(%arg0: i32) -> (i32, i32, i32) {
    %c0_i32 = arith.constant 0 : i32
    %c0_i32_0 = arith.constant 0 : i32
    %c0_i32_1 = arith.constant 0 : i32
    return %arg0, %c0_i32, %c0_i32_0 : i32, i32, i32
  }
  func.func @transform_10(%arg0: i32) -> (i32, i32, i32) {
    %c0_i32 = arith.constant 0 : i32
    %c0_i32_0 = arith.constant 0 : i32
    %c0_i32_1 = arith.constant 0 : i32
    return %arg0, %c0_i32, %c0_i32_0 : i32, i32, i32
  }
  func.func @transform_11(%arg0: i32) -> (i32, i32, i32) {
    %c0_i32 = arith.constant 0 : i32
    %c0_i32_0 = arith.constant 0 : i32
    %c0_i32_1 = arith.constant 0 : i32
    return %arg0, %c0_i32, %c0_i32_0 : i32, i32, i32
  }
  func.func @transform_12(%arg0: i32) -> (i32, i32, i32) {
    %c0_i32 = arith.constant 0 : i32
    %c0_i32_0 = arith.constant 0 : i32
    %c0_i32_1 = arith.constant 0 : i32
    return %arg0, %c0_i32, %c0_i32_0 : i32, i32, i32
  }
  func.func @transform_13(%arg0: i32) -> (i32, i32, i32) {
    %c0_i32 = arith.constant 0 : i32
    %c0_i32_0 = arith.constant 0 : i32
    %c0_i32_1 = arith.constant 0 : i32
    return %arg0, %c0_i32, %c0_i32_0 : i32, i32, i32
  }
  func.func @transform_14(%arg0: i32) -> (i32, i32, i32) {
    %c0_i32 = arith.constant 0 : i32
    %c0_i32_0 = arith.constant 0 : i32
    %c0_i32_1 = arith.constant 0 : i32
    return %arg0, %c0_i32, %c0_i32_0 : i32, i32, i32
  }
  func.func @transform_15(%arg0: i32) -> (i32, i32, i32) {
    %c0_i32 = arith.constant 0 : i32
    %c0_i32_0 = arith.constant 0 : i32
    %c0_i32_1 = arith.constant 0 : i32
    return %arg0, %c0_i32, %c0_i32_0 : i32, i32, i32
  }
  func.func @transform_16(%arg0: i32) -> (i32, i32) {
    %c0_i32 = arith.constant 0 : i32
    %c0_i32_0 = arith.constant 0 : i32
    %c0_i32_1 = arith.constant 0 : i32
    return %c0_i32, %c0_i32_0 : i32, i32
  }
}

</mosaic_0001>

<llo_original>
// kernel: bert_embedding_forward.1
$region0: #{bert_embedding_forward.1}
  #allocation0 [shape = 'u32[]', space=smem, size = 0x4, offset = 0x4, fixed_abs, tag = 'smem constant byte address 0x4 - core index']
  #allocation1 [shape = 'u32[144,128]{1,0:T(1,128)}', space=vmem, size = 0x12000, scoped, tag = 'internal scratch']
  #allocation2 [shape = 'f32[16,32]{1,0:T(8,128)}', space=vmem, size = 0x2000, scoped, tag = 'scratch operand']
  #allocation3 [shape = 'f32[16,32]{1,0:T(8,128)}', space=vmem, size = 0x2000, scoped, tag = 'scratch operand']
  %s0 = inlined_call_operand.vmem [shape: f32[16,32], index: 0, kind: input, shape index: {}]
  %s1 = inlined_call_operand.hbm [shape: f32[1,32], index: 1, kind: input, shape index: {}]
  %s2 = inlined_call_operand.hbm [shape: f32[1,32], index: 2, kind: input, shape index: {}]
  %s3 = inlined_call_operand.vmem [shape: f32[2,8], index: 3, kind: input, shape index: {}]
  %s4 = inlined_call_operand.vmem [shape: f32[12,32,96], index: 4, kind: input, shape index: {}]
  %s5 = inlined_call_operand.hbm [shape: f32[12,1,96], index: 5, kind: input, shape index: {}]
  %s6 = inlined_call_operand.vmem [shape: f32[12,32,32], index: 6, kind: input, shape index: {}]
  %s7 = inlined_call_operand.hbm [shape: f32[12,1,32], index: 7, kind: input, shape index: {}]
  %s8 = inlined_call_operand.hbm [shape: f32[12,1,32], index: 8, kind: input, shape index: {}]
  %s9 = inlined_call_operand.hbm [shape: f32[12,1,32], index: 9, kind: input, shape index: {}]
  %s10 = inlined_call_operand.vmem [shape: f32[12,32,64], index: 10, kind: input, shape index: {}]
  %s11 = inlined_call_operand.hbm [shape: f32[12,1,64], index: 11, kind: input, shape index: {}]
  %s12 = inlined_call_operand.vmem [shape: f32[12,64,32], index: 12, kind: input, shape index: {}]
  %s13 = inlined_call_operand.hbm [shape: f32[12,1,32], index: 13, kind: input, shape index: {}]
  %s14 = inlined_call_operand.hbm [shape: f32[12,1,32], index: 14, kind: input, shape index: {}]
  %s15 = inlined_call_operand.hbm [shape: f32[12,1,32], index: 15, kind: input, shape index: {}]
  %s16 = inlined_call_operand.hbm [shape: f32[2,32], index: 16, kind: output, shape index: {}]
  %s17 = sld [smem:[#allocation0]]
  $region149: #{bert_embedding_forward.1} parent=0
    _
  %s19 = ssub.s32 1, %s17
  %s20 = scalar_select 0, %s19, %s17
  $region1: #{bert_embedding_forward.1} parent=0
    #allocation4 [shape = 'u8[512]{0}', space=vmem, size = 0x400, scoped, tag = 'input window, operand 1, single buffered']
    #allocation5 [shape = 's32[2]{0}', space=sflag, size = 0x8, scoped, tag = 'scoped memory for bert_embedding_forward.1']
    #allocation6 [shape = 's32[2]{0}', space=sflag, size = 0x8, scoped, tag = 'scoped memory for bert_embedding_forward.1']
    #allocation7 [shape = 'u8[512]{0}', space=vmem, size = 0x400, scoped, tag = 'input window, operand 2, single buffered']
    #allocation8 [shape = 's32[1]{0}', space=sflag, size = 0x4, scoped, tag = 'scoped memory for bert_embedding_forward.1']
    #allocation9 [shape = 'u8[1024]{0}', space=vmem, size = 0x400, scoped, tag = 'input window, operand 5']
    #allocation10 [shape = 'u8[1024]{0}', space=vmem, size = 0x400, scoped, tag = 'input window, operand 7']
    #allocation11 [shape = 'u8[1024]{0}', space=vmem, size = 0x400, scoped, tag = 'input window, operand 8']
    #allocation12 [shape = 'u8[1024]{0}', space=vmem, size = 0x400, scoped, tag = 'input window, operand 9']
    #allocation13 [shape = 'u8[1024]{0}', space=vmem, size = 0x400, scoped, tag = 'input window, operand 11']
    #allocation14 [shape = 'u8[1024]{0}', space=vmem, size = 0x400, scoped, tag = 'input window, operand 13']
    #allocation15 [shape = 'u8[1024]{0}', space=vmem, size = 0x400, scoped, tag = 'input window, operand 14']
    #allocation16 [shape = 'u8[1024]{0}', space=vmem, size = 0x400, scoped, tag = 'input window, operand 15']
    #allocation17 [shape = 'u8[1024]{0}', space=vmem, size = 0x400, scoped, tag = 'output window, operand 0, single buffered']
    %21 = vsyncpa [#allocation5], 0
    %22 = vsyncpa [#allocation8], 0
    %23 = vsyncpa [#allocation6], 0
    loop: start=0, step=1, limit=14
    $region2: #{bert_embedding_forward.1} parent=1 // loop_pre_header
      _
    $region3: #{bert_embedding_forward.1} parent=1 // loop_header
      %s25 = sphi 0, %s29
      %p26 = scmp.ge.s32.totalorder %s25, 14
      %s33 = sphi 0, %s33
      %s35 = sphi 0, %s33
      %s36 = sphi 0, %s35
      %s50 = sphi 0, %s36
      %s54 = sphi 0, %s54
      %s56 = sphi 0, %s54
      %s57 = sphi 0, %s56
      %s71 = sphi 0, %s57
      %s75 = sphi 0, %s75
      %s77 = sphi 0, %s75
      %s78 = sphi 0, %s77
      %s92 = sphi 0, %s78
      %s96 = sphi 0, %s96
      %s98 = sphi 0, %s96
      %s99 = sphi 0, %s98
      %s113 = sphi 0, %s99
      %s119 = sphi 0, %s121
      %s122 = sphi 0, %s119
      %s123 = sphi 0, %s122
      %s139 = sphi 0, %s123
      %s145 = sphi 0, %s147
      %s148 = sphi 0, %s145
      %s149 = sphi 0, %s148
      %s165 = sphi 0, %s149
      %s171 = sphi 0, %s173
      %s174 = sphi 0, %s171
      %s175 = sphi 0, %s174
      %s191 = sphi 0, %s175
      %s197 = sphi 0, %s199
      %s200 = sphi 0, %s197
      %s201 = sphi 0, %s200
      %s217 = sphi 0, %s201
      %s223 = sphi 0, %s225
      %s226 = sphi 0, %s223
      %s227 = sphi 0, %s226
      %s243 = sphi 0, %s227
      %s249 = sphi 0, %s251
      %s252 = sphi 0, %s249
      %s253 = sphi 0, %s252
      %s269 = sphi 0, %s253
      %s275 = sphi 0, %s277
      %s278 = sphi 0, %s275
      %s279 = sphi 0, %s278
      %s295 = sphi 0, %s279
      %s301 = sphi 0, %s303
      %s304 = sphi 0, %s301
      %s305 = sphi 0, %s304
      %s321 = sphi 0, %s305
      %s327 = sphi 0, %s329
      %s330 = sphi 0, %s327
      %s331 = sphi 0, %s330
      %s347 = sphi 0, %s331
      %s353 = sphi 0, %s355
      %s356 = sphi 0, %s353
      %s357 = sphi 0, %s356
      %s373 = sphi 0, %s357
      %s379 = sphi 0, %s381
      %s382 = sphi 0, %s379
      %s383 = sphi 0, %s382
      %s399 = sphi 0, %s383
      %s405 = sphi 0, %s407
      %s408 = sphi 0, %s405
      %s409 = sphi 0, %s408
      %s425 = sphi 0, %s409
      %s429 = sphi 0, %s429
      %s431 = sphi 0, %s429
      %s432 = sphi 0, %s431
      %s446 = sphi 0, %s432
    $region4: #{bert_embedding_forward.1} parent=1 // loop_header_branch
      %28 = sbr.rel (%p26) target = $region8
    $region5: #{bert_embedding_forward.1} parent=1 // loop_body
      %s30 = ssub.s32 %s25, 1
      %s31 = ssub.s32 %s25, 2
      %s32 = sadd.s32 %s25, 1
      %s34 = sadd.s32 %s33, 1
      %p37 = scmp.eq.s32.totalorder %s25, 11
      %p38 = scmp.ne.s32.totalorder %s33, %s35
      %p39 = scmp.eq.s32.totalorder %s25, 0
      %p40 = por %p38, %p39
      %p41 = scmp.ne.s32.totalorder %s33, %s35
      %p42 = scmp.eq.s32.totalorder %s30, 11
      %p43 = por %p41, %p42
      %p44 = scmp.ne.s32.totalorder %s35, %s36
      %p45 = scmp.eq.s32.totalorder %s30, 0
      %p46 = por %p44, %p45
      %p47 = scmp.ne.s32.totalorder %s35, %s36
      %p48 = scmp.eq.s32.totalorder %s31, 11
      %p49 = por %p47, %p48
      %p51 = scmp.ne.s32.totalorder %s36, %s50
      %p52 = scmp.eq.s32.totalorder %s31, 0
      %p53 = por %p51, %p52
      %s55 = sadd.s32 %s54, 1
      %p58 = scmp.eq.s32.totalorder %s25, 11
      %p59 = scmp.ne.s32.totalorder %s54, %s56
      %p60 = scmp.eq.s32.totalorder %s25, 0
      %p61 = por %p59, %p60
      %p62 = scmp.ne.s32.totalorder %s54, %s56
      %p63 = scmp.eq.s32.totalorder %s30, 11
      %p64 = por %p62, %p63
      %p65 = scmp.ne.s32.totalorder %s56, %s57
      %p66 = scmp.eq.s32.totalorder %s30, 0
      %p67 = por %p65, %p66
      %p68 = scmp.ne.s32.totalorder %s56, %s57
      %p69 = scmp.eq.s32.totalorder %s31, 11
      %p70 = por %p68, %p69
      %p72 = scmp.ne.s32.totalorder %s57, %s71
      %p73 = scmp.eq.s32.totalorder %s31, 0
      %p74 = por %p72, %p73
      %s76 = sadd.s32 %s75, 1
      %p79 = scmp.eq.s32.totalorder %s25, 11
      %p80 = scmp.ne.s32.totalorder %s75, %s77
      %p81 = scmp.eq.s32.totalorder %s25, 0
      %p82 = por %p80, %p81
      %p83 = scmp.ne.s32.totalorder %s75, %s77
      %p84 = scmp.eq.s32.totalorder %s30, 11
      %p85 = por %p83, %p84
      %p86 = scmp.ne.s32.totalorder %s77, %s78
      %p87 = scmp.eq.s32.totalorder %s30, 0
      %p88 = por %p86, %p87
      %p89 = scmp.ne.s32.totalorder %s77, %s78
      %p90 = scmp.eq.s32.totalorder %s31, 11
      %p91 = por %p89, %p90
      %p93 = scmp.ne.s32.totalorder %s78, %s92
      %p94 = scmp.eq.s32.totalorder %s31, 0
      %p95 = por %p93, %p94
      %s97 = sadd.s32 %s96, 1
      %p100 = scmp.eq.s32.totalorder %s25, 11
      %p101 = scmp.ne.s32.totalorder %s96, %s98
      %p102 = scmp.eq.s32.totalorder %s25, 0
      %p103 = por %p101, %p102
      %p104 = scmp.ne.s32.totalorder %s96, %s98
      %p105 = scmp.eq.s32.totalorder %s30, 11
      %p106 = por %p104, %p105
      %p107 = scmp.ne.s32.totalorder %s98, %s99
      %p108 = scmp.eq.s32.totalorder %s30, 0
      %p109 = por %p107, %p108
      %p110 = scmp.ne.s32.totalorder %s98, %s99
      %p111 = scmp.eq.s32.totalorder %s31, 11
      %p112 = por %p110, %p111
      %p114 = scmp.ne.s32.totalorder %s99, %s113
      %p115 = scmp.eq.s32.totalorder %s31, 0
      %p116 = por %p114, %p115
      %s117 = ssub.s32 %s25, %s32
      %p118 = scmp.eq.s32.totalorder %s117, 0
      %s120 = sadd.s32 %s119, 1
      %s121 = scalar_select %p118, %s119, %s120
      %p124 = pneg %p118
      %p125 = scmp.eq.s32.totalorder %s25, 11
      %p126 = por %p124, %p125
      %p127 = scmp.ne.s32.totalorder %s119, %s122
      %p128 = scmp.eq.s32.totalorder %s25, 0
      %p129 = por %p127, %p128
      %p130 = scmp.ne.s32.totalorder %s119, %s122
      %p131 = scmp.eq.s32.totalorder %s30, 11
      %p132 = por %p130, %p131
      %p133 = scmp.ne.s32.totalorder %s122, %s123
      %p134 = scmp.eq.s32.totalorder %s30, 0
      %p135 = por %p133, %p134
      %p136 = scmp.ne.s32.totalorder %s122, %s123
      %p137 = scmp.eq.s32.totalorder %s31, 11
      %p138 = por %p136, %p137
      %p140 = scmp.ne.s32.totalorder %s123, %s139
      %p141 = scmp.eq.s32.totalorder %s31, 0
      %p142 = por %p140, %p141
      %s143 = ssub.s32 %s25, %s32
      %p144 = scmp.eq.s32.totalorder %s143, 0
      %s146 = sadd.s32 %s145, 1
      %s147 = scalar_select %p144, %s145, %s146
      %p150 = pneg %p144
      %p151 = scmp.eq.s32.totalorder %s25, 11
      %p152 = por %p150, %p151
      %p153 = scmp.ne.s32.totalorder %s145, %s148
      %p154 = scmp.eq.s32.totalorder %s25, 0
      %p155 = por %p153, %p154
      %p156 = scmp.ne.s32.totalorder %s145, %s148
      %p157 = scmp.eq.s32.totalorder %s30, 11
      %p158 = por %p156, %p157
      %p159 = scmp.ne.s32.totalorder %s148, %s149
      %p160 = scmp.eq.s32.totalorder %s30, 0
      %p161 = por %p159, %p160
      %p162 = scmp.ne.s32.totalorder %s148, %s149
      %p163 = scmp.eq.s32.totalorder %s31, 11
      %p164 = por %p162, %p163
      %p166 = scmp.ne.s32.totalorder %s149, %s165
      %p167 = scmp.eq.s32.totalorder %s31, 0
      %p168 = por %p166, %p167
      %s169 = ssub.s32 %s25, %s32
      %p170 = scmp.eq.s32.totalorder %s169, 0
      %s172 = sadd.s32 %s171, 1
      %s173 = scalar_select %p170, %s171, %s172
      %p176 = pneg %p170
      %p177 = scmp.eq.s32.totalorder %s25, 11
      %p178 = por %p176, %p177
      %p179 = scmp.ne.s32.totalorder %s171, %s174
      %p180 = scmp.eq.s32.totalorder %s25, 0
      %p181 = por %p179, %p180
      %p182 = scmp.ne.s32.totalorder %s171, %s174
      %p183 = scmp.eq.s32.totalorder %s30, 11
      %p184 = por %p182, %p183
      %p185 = scmp.ne.s32.totalorder %s174, %s175
      %p186 = scmp.eq.s32.totalorder %s30, 0
      %p187 = por %p185, %p186
      %p188 = scmp.ne.s32.totalorder %s174, %s175
      %p189 = scmp.eq.s32.totalorder %s31, 11
      %p190 = por %p188, %p189
      %p192 = scmp.ne.s32.totalorder %s175, %s191
      %p193 = scmp.eq.s32.totalorder %s31, 0
      %p194 = por %p192, %p193
      %s195 = ssub.s32 %s25, %s32
      %p196 = scmp.eq.s32.totalorder %s195, 0
      %s198 = sadd.s32 %s197, 1
      %s199 = scalar_select %p196, %s197, %s198
      %p202 = pneg %p196
      %p203 = scmp.eq.s32.totalorder %s25, 11
      %p204 = por %p202, %p203
      %p205 = scmp.ne.s32.totalorder %s197, %s200
      %p206 = scmp.eq.s32.totalorder %s25, 0
      %p207 = por %p205, %p206
      %p208 = scmp.ne.s32.totalorder %s197, %s200
      %p209 = scmp.eq.s32.totalorder %s30, 11
      %p210 = por %p208, %p209
      %p211 = scmp.ne.s32.totalorder %s200, %s201
      %p212 = scmp.eq.s32.totalorder %s30, 0
      %p213 = por %p211, %p212
      %p214 = scmp.ne.s32.totalorder %s200, %s201
      %p215 = scmp.eq.s32.totalorder %s31, 11
      %p216 = por %p214, %p215
      %p218 = scmp.ne.s32.totalorder %s201, %s217
      %p219 = scmp.eq.s32.totalorder %s31, 0
      %p220 = por %p218, %p219
      %s221 = ssub.s32 %s25, %s32
      %p222 = scmp.eq.s32.totalorder %s221, 0
      %s224 = sadd.s32 %s223, 1
      %s225 = scalar_select %p222, %s223, %s224
      %p228 = pneg %p222
      %p229 = scmp.eq.s32.totalorder %s25, 11
      %p230 = por %p228, %p229
      %p231 = scmp.ne.s32.totalorder %s223, %s226
      %p232 = scmp.eq.s32.totalorder %s25, 0
      %p233 = por %p231, %p232
      %p234 = scmp.ne.s32.totalorder %s223, %s226
      %p235 = scmp.eq.s32.totalorder %s30, 11
      %p236 = por %p234, %p235
      %p237 = scmp.ne.s32.totalorder %s226, %s227
      %p238 = scmp.eq.s32.totalorder %s30, 0
      %p239 = por %p237, %p238
      %p240 = scmp.ne.s32.totalorder %s226, %s227
      %p241 = scmp.eq.s32.totalorder %s31, 11
      %p242 = por %p240, %p241
      %p244 = scmp.ne.s32.totalorder %s227, %s243
      %p245 = scmp.eq.s32.totalorder %s31, 0
      %p246 = por %p244, %p245
      %s247 = ssub.s32 %s25, %s32
      %p248 = scmp.eq.s32.totalorder %s247, 0
      %s250 = sadd.s32 %s249, 1
      %s251 = scalar_select %p248, %s249, %s250
      %p254 = pneg %p248
      %p255 = scmp.eq.s32.totalorder %s25, 11
      %p256 = por %p254, %p255
      %p257 = scmp.ne.s32.totalorder %s249, %s252
      %p258 = scmp.eq.s32.totalorder %s25, 0
      %p259 = por %p257, %p258
      %p260 = scmp.ne.s32.totalorder %s249, %s252
      %p261 = scmp.eq.s32.totalorder %s30, 11
      %p262 = por %p260, %p261
      %p263 = scmp.ne.s32.totalorder %s252, %s253
      %p264 = scmp.eq.s32.totalorder %s30, 0
      %p265 = por %p263, %p264
      %p266 = scmp.ne.s32.totalorder %s252, %s253
      %p267 = scmp.eq.s32.totalorder %s31, 11
      %p268 = por %p266, %p267
      %p270 = scmp.ne.s32.totalorder %s253, %s269
      %p271 = scmp.eq.s32.totalorder %s31, 0
      %p272 = por %p270, %p271
      %s273 = ssub.s32 %s25, %s32
      %p274 = scmp.eq.s32.totalorder %s273, 0
      %s276 = sadd.s32 %s275, 1
      %s277 = scalar_select %p274, %s275, %s276
      %p280 = pneg %p274
      %p281 = scmp.eq.s32.totalorder %s25, 11
      %p282 = por %p280, %p281
      %p283 = scmp.ne.s32.totalorder %s275, %s278
      %p284 = scmp.eq.s32.totalorder %s25, 0
      %p285 = por %p283, %p284
      %p286 = scmp.ne.s32.totalorder %s275, %s278
      %p287 = scmp.eq.s32.totalorder %s30, 11
      %p288 = por %p286, %p287
      %p289 = scmp.ne.s32.totalorder %s278, %s279
      %p290 = scmp.eq.s32.totalorder %s30, 0
      %p291 = por %p289, %p290
      %p292 = scmp.ne.s32.totalorder %s278, %s279
      %p293 = scmp.eq.s32.totalorder %s31, 11
      %p294 = por %p292, %p293
      %p296 = scmp.ne.s32.totalorder %s279, %s295
      %p297 = scmp.eq.s32.totalorder %s31, 0
      %p298 = por %p296, %p297
      %s299 = ssub.s32 %s25, %s32
      %p300 = scmp.eq.s32.totalorder %s299, 0
      %s302 = sadd.s32 %s301, 1
      %s303 = scalar_select %p300, %s301, %s302
      %p306 = pneg %p300
      %p307 = scmp.eq.s32.totalorder %s25, 11
      %p308 = por %p306, %p307
      %p309 = scmp.ne.s32.totalorder %s301, %s304
      %p310 = scmp.eq.s32.totalorder %s25, 0
      %p311 = por %p309, %p310
      %p312 = scmp.ne.s32.totalorder %s301, %s304
      %p313 = scmp.eq.s32.totalorder %s30, 11
      %p314 = por %p312, %p313
      %p315 = scmp.ne.s32.totalorder %s304, %s305
      %p316 = scmp.eq.s32.totalorder %s30, 0
      %p317 = por %p315, %p316
      %p318 = scmp.ne.s32.totalorder %s304, %s305
      %p319 = scmp.eq.s32.totalorder %s31, 11
      %p320 = por %p318, %p319
      %p322 = scmp.ne.s32.totalorder %s305, %s321
      %p323 = scmp.eq.s32.totalorder %s31, 0
      %p324 = por %p322, %p323
      %s325 = ssub.s32 %s25, %s32
      %p326 = scmp.eq.s32.totalorder %s325, 0
      %s328 = sadd.s32 %s327, 1
      %s329 = scalar_select %p326, %s327, %s328
      %p332 = pneg %p326
      %p333 = scmp.eq.s32.totalorder %s25, 11
      %p334 = por %p332, %p333
      %p335 = scmp.ne.s32.totalorder %s327, %s330
      %p336 = scmp.eq.s32.totalorder %s25, 0
      %p337 = por %p335, %p336
      %p338 = scmp.ne.s32.totalorder %s327, %s330
      %p339 = scmp.eq.s32.totalorder %s30, 11
      %p340 = por %p338, %p339
      %p341 = scmp.ne.s32.totalorder %s330, %s331
      %p342 = scmp.eq.s32.totalorder %s30, 0
      %p343 = por %p341, %p342
      %p344 = scmp.ne.s32.totalorder %s330, %s331
      %p345 = scmp.eq.s32.totalorder %s31, 11
      %p346 = por %p344, %p345
      %p348 = scmp.ne.s32.totalorder %s331, %s347
      %p349 = scmp.eq.s32.totalorder %s31, 0
      %p350 = por %p348, %p349
      %s351 = ssub.s32 %s25, %s32
      %p352 = scmp.eq.s32.totalorder %s351, 0
      %s354 = sadd.s32 %s353, 1
      %s355 = scalar_select %p352, %s353, %s354
      %p358 = pneg %p352
      %p359 = scmp.eq.s32.totalorder %s25, 11
      %p360 = por %p358, %p359
      %p361 = scmp.ne.s32.totalorder %s353, %s356
      %p362 = scmp.eq.s32.totalorder %s25, 0
      %p363 = por %p361, %p362
      %p364 = scmp.ne.s32.totalorder %s353, %s356
      %p365 = scmp.eq.s32.totalorder %s30, 11
      %p366 = por %p364, %p365
      %p367 = scmp.ne.s32.totalorder %s356, %s357
      %p368 = scmp.eq.s32.totalorder %s30, 0
      %p369 = por %p367, %p368
      %p370 = scmp.ne.s32.totalorder %s356, %s357
      %p371 = scmp.eq.s32.totalorder %s31, 11
      %p372 = por %p370, %p371
      %p374 = scmp.ne.s32.totalorder %s357, %s373
      %p375 = scmp.eq.s32.totalorder %s31, 0
      %p376 = por %p374, %p375
      %s377 = ssub.s32 %s25, %s32
      %p378 = scmp.eq.s32.totalorder %s377, 0
      %s380 = sadd.s32 %s379, 1
      %s381 = scalar_select %p378, %s379, %s380
      %p384 = pneg %p378
      %p385 = scmp.eq.s32.totalorder %s25, 11
      %p386 = por %p384, %p385
      %p387 = scmp.ne.s32.totalorder %s379, %s382
      %p388 = scmp.eq.s32.totalorder %s25, 0
      %p389 = por %p387, %p388
      %p390 = scmp.ne.s32.totalorder %s379, %s382
      %p391 = scmp.eq.s32.totalorder %s30, 11
      %p392 = por %p390, %p391
      %p393 = scmp.ne.s32.totalorder %s382, %s383
      %p394 = scmp.eq.s32.totalorder %s30, 0
      %p395 = por %p393, %p394
      %p396 = scmp.ne.s32.totalorder %s382, %s383
      %p397 = scmp.eq.s32.totalorder %s31, 11
      %p398 = por %p396, %p397
      %p400 = scmp.ne.s32.totalorder %s383, %s399
      %p401 = scmp.eq.s32.totalorder %s31, 0
      %p402 = por %p400, %p401
      %s403 = ssub.s32 %s25, %s32
      %p404 = scmp.eq.s32.totalorder %s403, 0
      %s406 = sadd.s32 %s405, 1
      %s407 = scalar_select %p404, %s405, %s406
      %p410 = pneg %p404
      %p411 = scmp.eq.s32.totalorder %s25, 11
      %p412 = por %p410, %p411
      %p413 = scmp.ne.s32.totalorder %s405, %s408
      %p414 = scmp.eq.s32.totalorder %s25, 0
      %p415 = por %p413, %p414
      %p416 = scmp.ne.s32.totalorder %s405, %s408
      %p417 = scmp.eq.s32.totalorder %s30, 11
      %p418 = por %p416, %p417
      %p419 = scmp.ne.s32.totalorder %s408, %s409
      %p420 = scmp.eq.s32.totalorder %s30, 0
      %p421 = por %p419, %p420
      %p422 = scmp.ne.s32.totalorder %s408, %s409
      %p423 = scmp.eq.s32.totalorder %s31, 11
      %p424 = por %p422, %p423
      %p426 = scmp.ne.s32.totalorder %s409, %s425
      %p427 = scmp.eq.s32.totalorder %s31, 0
      %p428 = por %p426, %p427
      %s430 = sadd.s32 %s429, 1
      %p433 = scmp.eq.s32.totalorder %s25, 11
      %p434 = scmp.ne.s32.totalorder %s429, %s431
      %p435 = scmp.eq.s32.totalorder %s25, 0
      %p436 = por %p434, %p435
      %p437 = scmp.ne.s32.totalorder %s429, %s431
      %p438 = scmp.eq.s32.totalorder %s30, 11
      %p439 = por %p437, %p438
      %p440 = scmp.ne.s32.totalorder %s431, %s432
      %p441 = scmp.eq.s32.totalorder %s30, 0
      %p442 = por %p440, %p441
      %p443 = scmp.ne.s32.totalorder %s431, %s432
      %p444 = scmp.eq.s32.totalorder %s31, 11
      %p445 = por %p443, %p444
      %p447 = scmp.ne.s32.totalorder %s432, %s446
      %p448 = scmp.eq.s32.totalorder %s31, 0
      %p449 = por %p447, %p448
      %p450 = scmp.le.s32.totalorder 1, %s25
      %p451 = scmp.lt.s32.totalorder %s25, 13
      %p452 = pnand %p450, %p451
      %p453 = pneg %p452
      // Predicated region
      $region9: #{bert_embedding_forward.1} parent=5 // pred_check
        _
      $region10: #{bert_embedding_forward.1} parent=5 // pred_check_branch
        %455 = sbr.rel (%p452) target = $region12
      $region11: #{bert_embedding_forward.1} parent=5 // pred_region
        %s456 = ssub.s32 %s25, 1
        // Predicated region
        $region13: #{bert_embedding_forward.1} parent=11 // pred_check
          %p457 = pneg %p46
        $region14: #{bert_embedding_forward.1} parent=11 // pred_check_branch
          %459 = sbr.rel (%p457) target = $region16
        $region15: #{bert_embedding_forward.1} parent=11 // pred_region
          _
        $region16: #{bert_embedding_forward.1} parent=11 // pred_fallthru
          _
        // Predicated region
        $region17: #{bert_embedding_forward.1} parent=11 // pred_check
          %p460 = pneg %p67
        $region18: #{bert_embedding_forward.1} parent=11 // pred_check_branch
          %462 = sbr.rel (%p460) target = $region20
        $region19: #{bert_embedding_forward.1} parent=11 // pred_region
          %s464 = ssub.s32 16, 16
          %465 = vsyncadd [#allocation5], %s464
          %s467 = sshll.u32 [#allocation4], 4
          %s468 = int_to_ptr.vmem [resolvable:$true] %s467
          %470 = dma.hbm_to_vmem [thread:$0]  %s1, 16, %s468, [#allocation5]
        $region20: #{bert_embedding_forward.1} parent=11 // pred_fallthru
          _
        // Predicated region
        $region21: #{bert_embedding_forward.1} parent=11 // pred_check
          %p471 = pneg %p88
        $region22: #{bert_embedding_forward.1} parent=11 // pred_check_branch
          %473 = sbr.rel (%p471) target = $region24
        $region23: #{bert_embedding_forward.1} parent=11 // pred_region
          %s475 = ssub.s32 16, 16
          %476 = vsyncadd [#allocation8], %s475
          %s478 = sshll.u32 [#allocation7], 4
          %s479 = int_to_ptr.vmem [resolvable:$true] %s478
          %481 = dma.hbm_to_vmem [thread:$0]  %s2, 16, %s479, [#allocation8]
        $region24: #{bert_embedding_forward.1} parent=11 // pred_fallthru
          _
        // Predicated region
        $region25: #{bert_embedding_forward.1} parent=11 // pred_check
          %p482 = pneg %p109
        $region26: #{bert_embedding_forward.1} parent=11 // pred_check_branch
          %484 = sbr.rel (%p482) target = $region28
        $region27: #{bert_embedding_forward.1} parent=11 // pred_region
          _
        $region28: #{bert_embedding_forward.1} parent=11 // pred_fallthru
          _
      $region12: #{bert_embedding_forward.1} parent=5 // pred_fallthru
        _
      %p485 = scmp.lt.s32.totalorder %s25, 12
      // Predicated region
      $region29: #{bert_embedding_forward.1} parent=5 // pred_check
        %p486 = pneg %p485
      $region30: #{bert_embedding_forward.1} parent=5 // pred_check_branch
        %488 = sbr.rel (%p486) target = $region32
      $region31: #{bert_embedding_forward.1} parent=5 // pred_region
        // Predicated region
        $region33: #{bert_embedding_forward.1} parent=31 // pred_check
          %p489 = pneg %p129
        $region34: #{bert_embedding_forward.1} parent=31 // pred_check_branch
          %491 = sbr.rel (%p489) target = $region36
        $region35: #{bert_embedding_forward.1} parent=31 // pred_region
          %p492 = scmp.lt.s32.totalorder %s25, 11
          %s493 = scalar_select %p492, %s25, 11
          %s494 = smul.addr %s493, 4
          %s495 = smul.addr %s494, 8
          %s496 = scalar_lea.vmem %s4, %s495
        $region36: #{bert_embedding_forward.1} parent=31 // pred_fallthru
          _
        // Predicated region
        $region37: #{bert_embedding_forward.1} parent=31 // pred_check
          %p497 = pneg %p155
        $region38: #{bert_embedding_forward.1} parent=31 // pred_check_branch
          %499 = sbr.rel (%p497) target = $region40
        $region39: #{bert_embedding_forward.1} parent=31 // pred_region
          %s500 = sand.u32 %s25, 1
          %s501 = scalar_lea.sflag [#allocation5], %s500
          %s502 = sand.u32 %s145, 1
          %s503 = scalar_lea.vmem [#allocation9], %s502
          %s505 = ssub.s32 16, 16
          %506 = vsyncadd %s501, %s505
          %s507 = smul.addr %s25, 16
          %s508 = scalar_lea.hbm %s5, %s507
          %s510 = sshll.u32 %s503, 4
          %s511 = int_to_ptr.vmem [resolvable:$true] %s510
          %513 = dma.hbm_to_vmem [thread:$0]  %s508, 16, %s511, %s501
        $region40: #{bert_embedding_forward.1} parent=31 // pred_fallthru
          _
        // Predicated region
        $region41: #{bert_embedding_forward.1} parent=31 // pred_check
          %p514 = pneg %p181
        $region42: #{bert_embedding_forward.1} parent=31 // pred_check_branch
          %516 = sbr.rel (%p514) target = $region44
        $region43: #{bert_embedding_forward.1} parent=31 // pred_region
          %p517 = scmp.lt.s32.totalorder %s25, 11
          %s518 = scalar_select %p517, %s25, 11
          %s519 = smul.addr %s518, 4
          %s520 = smul.addr %s519, 8
          %s521 = scalar_lea.vmem %s6, %s520
        $region44: #{bert_embedding_forward.1} parent=31 // pred_fallthru
          _
        // Predicated region
        $region45: #{bert_embedding_forward.1} parent=31 // pred_check
          %p522 = pneg %p207
        $region46: #{bert_embedding_forward.1} parent=31 // pred_check_branch
          %524 = sbr.rel (%p522) target = $region48
        $region47: #{bert_embedding_forward.1} parent=31 // pred_region
          %s525 = sand.u32 %s25, 1
          %s526 = scalar_lea.sflag [#allocation5], %s525
          %s527 = sand.u32 %s197, 1
          %s528 = scalar_lea.vmem [#allocation10], %s527
          %s530 = ssub.s32 16, 16
          %531 = vsyncadd %s526, %s530
          %s532 = smul.addr %s25, 16
          %s533 = scalar_lea.hbm %s7, %s532
          %s535 = sshll.u32 %s528, 4
          %s536 = int_to_ptr.vmem [resolvable:$true] %s535
          %538 = dma.hbm_to_vmem [thread:$0]  %s533, 16, %s536, %s526
        $region48: #{bert_embedding_forward.1} parent=31 // pred_fallthru
          _
        // Predicated region
        $region49: #{bert_embedding_forward.1} parent=31 // pred_check
          %p539 = pneg %p233
        $region50: #{bert_embedding_forward.1} parent=31 // pred_check_branch
          %541 = sbr.rel (%p539) target = $region52
        $region51: #{bert_embedding_forward.1} parent=31 // pred_region
          %s542 = sand.u32 %s25, 1
          %s543 = scalar_lea.sflag [#allocation5], %s542
          %s544 = sand.u32 %s223, 1
          %s545 = scalar_lea.vmem [#allocation11], %s544
          %s547 = ssub.s32 16, 16
          %548 = vsyncadd %s543, %s547
          %s549 = smul.addr %s25, 16
          %s550 = scalar_lea.hbm %s8, %s549
          %s552 = sshll.u32 %s545, 4
          %s553 = int_to_ptr.vmem [resolvable:$true] %s552
          %555 = dma.hbm_to_vmem [thread:$0]  %s550, 16, %s553, %s543
        $region52: #{bert_embedding_forward.1} parent=31 // pred_fallthru
          _
        // Predicated region
        $region53: #{bert_embedding_forward.1} parent=31 // pred_check
          %p556 = pneg %p259
        $region54: #{bert_embedding_forward.1} parent=31 // pred_check_branch
          %558 = sbr.rel (%p556) target = $region56
        $region55: #{bert_embedding_forward.1} parent=31 // pred_region
          %s559 = sand.u32 %s25, 1
          %s560 = scalar_lea.sflag [#allocation5], %s559
          %s561 = sand.u32 %s249, 1
          %s562 = scalar_lea.vmem [#allocation12], %s561
          %s564 = ssub.s32 16, 16
          %565 = vsyncadd %s560, %s564
          %s566 = smul.addr %s25, 16
          %s567 = scalar_lea.hbm %s9, %s566
          %s569 = sshll.u32 %s562, 4
          %s570 = int_to_ptr.vmem [resolvable:$true] %s569
          %572 = dma.hbm_to_vmem [thread:$0]  %s567, 16, %s570, %s560
        $region56: #{bert_embedding_forward.1} parent=31 // pred_fallthru
          _
        // Predicated region
        $region57: #{bert_embedding_forward.1} parent=31 // pred_check
          %p573 = pneg %p285
        $region58: #{bert_embedding_forward.1} parent=31 // pred_check_branch
          %575 = sbr.rel (%p573) target = $region60
        $region59: #{bert_embedding_forward.1} parent=31 // pred_region
          %p576 = scmp.lt.s32.totalorder %s25, 11
          %s577 = scalar_select %p576, %s25, 11
          %s578 = smul.addr %s577, 4
          %s579 = smul.addr %s578, 8
          %s580 = scalar_lea.vmem %s10, %s579
        $region60: #{bert_embedding_forward.1} parent=31 // pred_fallthru
          _
        // Predicated region
        $region61: #{bert_embedding_forward.1} parent=31 // pred_check
          %p581 = pneg %p311
        $region62: #{bert_embedding_forward.1} parent=31 // pred_check_branch
          %583 = sbr.rel (%p581) target = $region64
        $region63: #{bert_embedding_forward.1} parent=31 // pred_region
          %s584 = sand.u32 %s25, 1
          %s585 = scalar_lea.sflag [#allocation5], %s584
          %s586 = sand.u32 %s301, 1
          %s587 = scalar_lea.vmem [#allocation13], %s586
          %s589 = ssub.s32 16, 16
          %590 = vsyncadd %s585, %s589
          %s591 = smul.addr %s25, 16
          %s592 = scalar_lea.hbm %s11, %s591
          %s594 = sshll.u32 %s587, 4
          %s595 = int_to_ptr.vmem [resolvable:$true] %s594
          %597 = dma.hbm_to_vmem [thread:$0]  %s592, 16, %s595, %s585
        $region64: #{bert_embedding_forward.1} parent=31 // pred_fallthru
          _
        // Predicated region
        $region65: #{bert_embedding_forward.1} parent=31 // pred_check
          %p598 = pneg %p337
        $region66: #{bert_embedding_forward.1} parent=31 // pred_check_branch
          %600 = sbr.rel (%p598) target = $region68
        $region67: #{bert_embedding_forward.1} parent=31 // pred_region
          %p601 = scmp.lt.s32.totalorder %s25, 11
          %s602 = scalar_select %p601, %s25, 11
          %s603 = smul.addr %s602, 8
          %s604 = smul.addr %s603, 8
          %s605 = scalar_lea.vmem %s12, %s604
        $region68: #{bert_embedding_forward.1} parent=31 // pred_fallthru
          _
        // Predicated region
        $region69: #{bert_embedding_forward.1} parent=31 // pred_check
          %p606 = pneg %p363
        $region70: #{bert_embedding_forward.1} parent=31 // pred_check_branch
          %608 = sbr.rel (%p606) target = $region72
        $region71: #{bert_embedding_forward.1} parent=31 // pred_region
          %s609 = sand.u32 %s25, 1
          %s610 = scalar_lea.sflag [#allocation5], %s609
          %s611 = sand.u32 %s353, 1
          %s612 = scalar_lea.vmem [#allocation14], %s611
          %s614 = ssub.s32 16, 16
          %615 = vsyncadd %s610, %s614
          %s616 = smul.addr %s25, 16
          %s617 = scalar_lea.hbm %s13, %s616
          %s619 = sshll.u32 %s612, 4
          %s620 = int_to_ptr.vmem [resolvable:$true] %s619
          %622 = dma.hbm_to_vmem [thread:$0]  %s617, 16, %s620, %s610
        $region72: #{bert_embedding_forward.1} parent=31 // pred_fallthru
          _
        // Predicated region
        $region73: #{bert_embedding_forward.1} parent=31 // pred_check
          %p623 = pneg %p389
        $region74: #{bert_embedding_forward.1} parent=31 // pred_check_branch
          %625 = sbr.rel (%p623) target = $region76
        $region75: #{bert_embedding_forward.1} parent=31 // pred_region
          %s626 = sand.u32 %s25, 1
          %s627 = scalar_lea.sflag [#allocation5], %s626
          %s628 = sand.u32 %s379, 1
          %s629 = scalar_lea.vmem [#allocation15], %s628
          %s631 = ssub.s32 16, 16
          %632 = vsyncadd %s627, %s631
          %s633 = smul.addr %s25, 16
          %s634 = scalar_lea.hbm %s14, %s633
          %s636 = sshll.u32 %s629, 4
          %s637 = int_to_ptr.vmem [resolvable:$true] %s636
          %639 = dma.hbm_to_vmem [thread:$0]  %s634, 16, %s637, %s627
        $region76: #{bert_embedding_forward.1} parent=31 // pred_fallthru
          _
        // Predicated region
        $region77: #{bert_embedding_forward.1} parent=31 // pred_check
          %p640 = pneg %p415
        $region78: #{bert_embedding_forward.1} parent=31 // pred_check_branch
          %642 = sbr.rel (%p640) target = $region80
        $region79: #{bert_embedding_forward.1} parent=31 // pred_region
          %s643 = sand.u32 %s25, 1
          %s644 = scalar_lea.sflag [#allocation5], %s643
          %s645 = sand.u32 %s405, 1
          %s646 = scalar_lea.vmem [#allocation16], %s645
          %s648 = ssub.s32 16, 16
          %649 = vsyncadd %s644, %s648
          %s650 = smul.addr %s25, 16
          %s651 = scalar_lea.hbm %s15, %s650
          %s653 = sshll.u32 %s646, 4
          %s654 = int_to_ptr.vmem [resolvable:$true] %s653
          %656 = dma.hbm_to_vmem [thread:$0]  %s651, 16, %s654, %s644
        $region80: #{bert_embedding_forward.1} parent=31 // pred_fallthru
          _
      $region32: #{bert_embedding_forward.1} parent=5 // pred_fallthru
        _
      %p657 = scmp.le.s32.totalorder 1, %s25
      %p658 = scmp.lt.s32.totalorder %s25, 13
      %p659 = pnand %p657, %p658
      %p660 = pneg %p659
      // Predicated region
      $region81: #{bert_embedding_forward.1} parent=5 // pred_check
        _
      $region82: #{bert_embedding_forward.1} parent=5 // pred_check_branch
        %662 = sbr.rel (%p659) target = $region84
      $region83: #{bert_embedding_forward.1} parent=5 // pred_region
        %s663 = ssub.s32 %s25, 1
        // Predicated region
        $region85: #{bert_embedding_forward.1} parent=83 // pred_check
          %p664 = pneg %p67
        $region86: #{bert_embedding_forward.1} parent=83 // pred_check_branch
          %666 = sbr.rel (%p664) target = $region88
        $region87: #{bert_embedding_forward.1} parent=83 // pred_region
          %667 = dma.done [#allocation5], 16
        $region88: #{bert_embedding_forward.1} parent=83 // pred_fallthru
          _
        // Predicated region
        $region89: #{bert_embedding_forward.1} parent=83 // pred_check
          %p668 = pneg %p88
        $region90: #{bert_embedding_forward.1} parent=83 // pred_check_branch
          %670 = sbr.rel (%p668) target = $region92
        $region91: #{bert_embedding_forward.1} parent=83 // pred_region
          %671 = dma.done [#allocation8], 16
        $region92: #{bert_embedding_forward.1} parent=83 // pred_fallthru
          _
        %s672 = sand.u32 %s30, 1
        %s673 = scalar_lea.sflag [#allocation5], %s672
        %s674 = sand.u32 %s148, 1
        %s675 = scalar_lea.vmem [#allocation9], %s674
        // Predicated region
        $region93: #{bert_embedding_forward.1} parent=83 // pred_check
          %p676 = pneg %p161
        $region94: #{bert_embedding_forward.1} parent=83 // pred_check_branch
          %678 = sbr.rel (%p676) target = $region96
        $region95: #{bert_embedding_forward.1} parent=83 // pred_region
          %679 = dma.done %s673, 16
        $region96: #{bert_embedding_forward.1} parent=83 // pred_fallthru
          _
        %s680 = sand.u32 %s30, 1
        %s681 = scalar_lea.sflag [#allocation5], %s680
        %s682 = sand.u32 %s200, 1
        %s683 = scalar_lea.vmem [#allocation10], %s682
        // Predicated region
        $region97: #{bert_embedding_forward.1} parent=83 // pred_check
          %p684 = pneg %p213
        $region98: #{bert_embedding_forward.1} parent=83 // pred_check_branch
          %686 = sbr.rel (%p684) target = $region100
        $region99: #{bert_embedding_forward.1} parent=83 // pred_region
          %687 = dma.done %s681, 16
        $region100: #{bert_embedding_forward.1} parent=83 // pred_fallthru
          _
        %s688 = sand.u32 %s30, 1
        %s689 = scalar_lea.sflag [#allocation5], %s688
        %s690 = sand.u32 %s226, 1
        %s691 = scalar_lea.vmem [#allocation11], %s690
        // Predicated region
        $region101: #{bert_embedding_forward.1} parent=83 // pred_check
          %p692 = pneg %p239
        $region102: #{bert_embedding_forward.1} parent=83 // pred_check_branch
          %694 = sbr.rel (%p692) target = $region104
        $region103: #{bert_embedding_forward.1} parent=83 // pred_region
          %695 = dma.done %s689, 16
        $region104: #{bert_embedding_forward.1} parent=83 // pred_fallthru
          _
        %s696 = sand.u32 %s30, 1
        %s697 = scalar_lea.sflag [#allocation5], %s696
        %s698 = sand.u32 %s252, 1
        %s699 = scalar_lea.vmem [#allocation12], %s698
        // Predicated region
        $region105: #{bert_embedding_forward.1} parent=83 // pred_check
          %p700 = pneg %p265
        $region106: #{bert_embedding_forward.1} parent=83 // pred_check_branch
          %702 = sbr.rel (%p700) target = $region108
        $region107: #{bert_embedding_forward.1} parent=83 // pred_region
          %703 = dma.done %s697, 16
        $region108: #{bert_embedding_forward.1} parent=83 // pred_fallthru
          _
        %s704 = sand.u32 %s30, 1
        %s705 = scalar_lea.sflag [#allocation5], %s704
        %s706 = sand.u32 %s304, 1
        %s707 = scalar_lea.vmem [#allocation13], %s706
        // Predicated region
        $region109: #{bert_embedding_forward.1} parent=83 // pred_check
          %p708 = pneg %p317
        $region110: #{bert_embedding_forward.1} parent=83 // pred_check_branch
          %710 = sbr.rel (%p708) target = $region112
        $region111: #{bert_embedding_forward.1} parent=83 // pred_region
          %711 = dma.done %s705, 16
        $region112: #{bert_embedding_forward.1} parent=83 // pred_fallthru
          _
        %s712 = sand.u32 %s30, 1
        %s713 = scalar_lea.sflag [#allocation5], %s712
        %s714 = sand.u32 %s356, 1
        %s715 = scalar_lea.vmem [#allocation14], %s714
        // Predicated region
        $region113: #{bert_embedding_forward.1} parent=83 // pred_check
          %p716 = pneg %p369
        $region114: #{bert_embedding_forward.1} parent=83 // pred_check_branch
          %718 = sbr.rel (%p716) target = $region116
        $region115: #{bert_embedding_forward.1} parent=83 // pred_region
          %719 = dma.done %s713, 16
        $region116: #{bert_embedding_forward.1} parent=83 // pred_fallthru
          _
        %s720 = sand.u32 %s30, 1
        %s721 = scalar_lea.sflag [#allocation5], %s720
        %s722 = sand.u32 %s382, 1
        %s723 = scalar_lea.vmem [#allocation15], %s722
        // Predicated region
        $region117: #{bert_embedding_forward.1} parent=83 // pred_check
          %p724 = pneg %p395
        $region118: #{bert_embedding_forward.1} parent=83 // pred_check_branch
          %726 = sbr.rel (%p724) target = $region120
        $region119: #{bert_embedding_forward.1} parent=83 // pred_region
          %727 = dma.done %s721, 16
        $region120: #{bert_embedding_forward.1} parent=83 // pred_fallthru
          _
        %s728 = sand.u32 %s30, 1
        %s729 = scalar_lea.sflag [#allocation5], %s728
        %s730 = sand.u32 %s408, 1
        %s731 = scalar_lea.vmem [#allocation16], %s730
        // Predicated region
        $region121: #{bert_embedding_forward.1} parent=83 // pred_check
          %p732 = pneg %p421
        $region122: #{bert_embedding_forward.1} parent=83 // pred_check_branch
          %734 = sbr.rel (%p732) target = $region124
        $region123: #{bert_embedding_forward.1} parent=83 // pred_region
          %735 = dma.done %s729, 16
        $region124: #{bert_embedding_forward.1} parent=83 // pred_fallthru
          _
        %p736 = pneg %p46
        %p737 = pneg %p43
        %p738 = pneg %p67
        %p739 = pneg %p64
        %p740 = pneg %p88
        %p741 = pneg %p85
        %p742 = pneg %p109
        %p743 = pneg %p106
        %p744 = scmp.lt.s32.totalorder %s30, 11
        %s745 = scalar_select %p744, %s30, 11
        %s746 = smul.addr %s745, 4
        %s747 = smul.addr %s746, 8
        %s748 = scalar_lea.vmem %s4, %s747
        %p749 = pneg %p135
        %p750 = pneg %p132
        %s751 = sand.u32 %s30, 1
        %s752 = scalar_lea.sflag [#allocation5], %s751
        %s753 = sand.u32 %s148, 1
        %s754 = scalar_lea.vmem [#allocation9], %s753
        %p755 = pneg %p161
        %p756 = pneg %p158
        %p757 = scmp.lt.s32.totalorder %s30, 11
        %s758 = scalar_select %p757, %s30, 11
        %s759 = smul.addr %s758, 4
        %s760 = smul.addr %s759, 8
        %s761 = scalar_lea.vmem %s6, %s760
        %p762 = pneg %p187
        %p763 = pneg %p184
        %s764 = sand.u32 %s30, 1
        %s765 = scalar_lea.sflag [#allocation5], %s764
        %s766 = sand.u32 %s200, 1
        %s767 = scalar_lea.vmem [#allocation10], %s766
        %p768 = pneg %p213
        %p769 = pneg %p210
        %s770 = sand.u32 %s30, 1
        %s771 = scalar_lea.sflag [#allocation5], %s770
        %s772 = sand.u32 %s226, 1
        %s773 = scalar_lea.vmem [#allocation11], %s772
        %p774 = pneg %p239
        %p775 = pneg %p236
        %s776 = sand.u32 %s30, 1
        %s777 = scalar_lea.sflag [#allocation5], %s776
        %s778 = sand.u32 %s252, 1
        %s779 = scalar_lea.vmem [#allocation12], %s778
        %p780 = pneg %p265
        %p781 = pneg %p262
        %p782 = scmp.lt.s32.totalorder %s30, 11
        %s783 = scalar_select %p782, %s30, 11
        %s784 = smul.addr %s783, 4
        %s785 = smul.addr %s784, 8
        %s786 = scalar_lea.vmem %s10, %s785
        %p787 = pneg %p291
        %p788 = pneg %p288
        %s789 = sand.u32 %s30, 1
        %s790 = scalar_lea.sflag [#allocation5], %s789
        %s791 = sand.u32 %s304, 1
        %s792 = scalar_lea.vmem [#allocation13], %s791
        %p793 = pneg %p317
        %p794 = pneg %p314
        %p795 = scmp.lt.s32.totalorder %s30, 11
        %s796 = scalar_select %p795, %s30, 11
        %s797 = smul.addr %s796, 8
        %s798 = smul.addr %s797, 8
        %s799 = scalar_lea.vmem %s12, %s798
        %p800 = pneg %p343
        %p801 = pneg %p340
        %s802 = sand.u32 %s30, 1
        %s803 = scalar_lea.sflag [#allocation5], %s802
        %s804 = sand.u32 %s356, 1
        %s805 = scalar_lea.vmem [#allocation14], %s804
        %p806 = pneg %p369
        %p807 = pneg %p366
        %s808 = sand.u32 %s30, 1
        %s809 = scalar_lea.sflag [#allocation5], %s808
        %s810 = sand.u32 %s382, 1
        %s811 = scalar_lea.vmem [#allocation15], %s810
        %p812 = pneg %p395
        %p813 = pneg %p392
        %s814 = sand.u32 %s30, 1
        %s815 = scalar_lea.sflag [#allocation5], %s814
        %s816 = sand.u32 %s408, 1
        %s817 = scalar_lea.vmem [#allocation16], %s816
        %p818 = pneg %p421
        %p819 = pneg %p418
        %p820 = pneg %p442
        %p821 = pneg %p439
        %p822 = scmp.lt.s32.totalorder %s30, 11
        %s823 = scalar_select %p822, %s30, 11
        %s824 = smul.addr %s823, 4
        %s825 = smul.addr %s824, 8
        %s826 = scalar_lea.vmem %s4, %s825
        %p827 = scmp.lt.s32.totalorder %s30, 11
        %s828 = scalar_select %p827, %s30, 11
        %s829 = smul.addr %s828, 4
        %s830 = smul.addr %s829, 8
        %s831 = scalar_lea.vmem %s6, %s830
        %p832 = scmp.lt.s32.totalorder %s30, 11
        %s833 = scalar_select %p832, %s30, 11
        %s834 = smul.addr %s833, 4
        %s835 = smul.addr %s834, 8
        %s836 = scalar_lea.vmem %s10, %s835
        %p837 = scmp.lt.s32.totalorder %s30, 11
        %s838 = scalar_select %p837, %s30, 11
        %s839 = smul.addr %s838, 8
        %s840 = smul.addr %s839, 8
        %s841 = scalar_lea.vmem %s12, %s840
        %p842 = scmp.eq.s32.totalorder %s30, 0
        // Predicated region
        $region125: #{bert_embedding_forward.1} parent=83 // pred_check
          %p843 = pneg %p842
        $region126: #{bert_embedding_forward.1} parent=83 // pred_check_branch
          %845 = sbr.rel (%p843) target = $region128
        $region127: #{bert_embedding_forward.1} parent=83 // pred_region
          %v846 = vld [vmem:[%s0] sm:$0xff]
          %v847 = vld [vmem:[%s0 + $0x8] sm:$0xff]
          %v848 = vld [vmem:[#allocation4] sm:$0x1]
          %v849 = vld [vmem:[#allocation7] sm:$0x1]
          %vm850 = vcmask 261120
          %v851 = vsel %vm850, %v846, 0.0
          %852 = vadd.xlane.f32.xlu0 %v851
          %v853 = vpop.xlane.xlu0 %852
          %v854 = vsel %vm850, %v847, 0.0
          %855 = vadd.xlane.f32.xlu0 %v854
          %v856 = vpop.xlane.xlu0 %855
          %v857 = vrcp.pop 32.0
          %v858 = vmul.f32 %v853, %v857
          %v859 = vmul.f32 %v856, %v857
          %v860 = vsub.f32 %v846, %v858
          %v861 = vsub.f32 %v847, %v859
          %v862 = vmul.f32 %v860, %v860
          %v863 = vmul.f32 %v861, %v861
          %v864 = vsel %vm850, %v862, 0.0
          %865 = vadd.xlane.f32.xlu0 %v864
          %v866 = vpop.xlane.xlu0 %865
          %v867 = vsel %vm850, %v863, 0.0
          %868 = vadd.xlane.f32.xlu0 %v867
          %v869 = vpop.xlane.xlu0 %868
          %v870 = vmul.f32 %v866, %v857
          %v871 = vmul.f32 %v869, %v857
          %v872 = vadd.f32 %v870, 1e-12
          %v873 = vadd.f32 %v871, 1e-12
          %v874 = vrsqrt.pop %v872
          %v875 = vrsqrt.pop %v873
          %v876 = vmul.f32 %v860, %v874
          %v877 = vmul.f32 %v861, %v875
          %v879 = vlaneseq
          %v880 = vshrl.u32 %v879, 7
          %v881 = vsub.s32 0, %v880
          %v882 = vrot.slane %v848, %v881
          %v884 = vmul.f32 %v876, %v882
          %v885 = vmul.f32 %v877, %v882
          %v887 = vlaneseq
          %v888 = vshrl.u32 %v887, 7
          %v889 = vsub.s32 0, %v888
          %v890 = vrot.slane %v849, %v889
          %v892 = vadd.f32 %v884, %v890
          %v893 = vadd.f32 %v885, %v890
          %894 = vst.msk [vmem:[#allocation2] sm:$0xff] %vm850, %v892
          %895 = vst.msk [vmem:[#allocation2 + $0x8] sm:$0xff] %vm850, %v893
          %vm896 = vcmask 254976
          %897 = vst.msk [vmem:[#allocation17] sm:$0x3] %vm896, 0.0
        $region128: #{bert_embedding_forward.1} parent=83 // pred_fallthru
          _
        %v898 = vld [vmem:[#allocation2] sm:$0xff]
        %v899 = vld [vmem:[#allocation2 + $0x8] sm:$0xff]
        %v900 = vld [vmem:[%s3] sm:$0x3]
        %v901 = vld [vmem:[%s826] sm:$0xff]
        %v902 = vld [vmem:[%s826 + $0x8] sm:$0xff]
        %v903 = vld [vmem:[%s826 + $0x10] sm:$0xff]
        %v904 = vld [vmem:[%s826 + $0x18] sm:$0xff]
        %v905 = vld [vmem:[%s675] sm:$0x1]
        %v907 = vlaneseq
        %v908 = vshrl.u32 %v907, 7
        %v909 = vsub.s32 0, %v908
        %v910 = vrot.slane %v905, %v909
        %vm912 = vcmask 261120
        %v914 = vsel %vm912, %v898, 0
        %v917 = vsel %vm912, %v899, 0
        %919 = vmatprep.subr.mxu0 0.0
        %920 = vmatpush1.msra.mxu0 0.0
        %921 = vmatprep.subr.mxu0 0.0
        %922 = vmatpush1.msra.mxu0 0.0
        %923 = vmatprep.subr.mxu0 0.0
        %924 = vmatpush1.msra.mxu0 0.0
        %925 = vmatprep.subr.mxu0 0.0
        %926 = vmatpush1.msra.mxu0 0.0
        %927 = vmatprep.subr.mxu0 0.0
        %928 = vmatpush1.msra.mxu0 0.0
        %929 = vmatprep.subr.mxu0 0.0
        %930 = vmatpush1.msra.mxu0 0.0
        %931 = vmatprep.subr.mxu0 0.0
        %932 = vmatpush1.msra.mxu0 0.0
        %933 = vmatprep.subr.mxu0 0.0
        %934 = vmatpush1.msra.mxu0 0.0
        %935 = vmatprep.subr.mxu0 0.0
        %936 = vmatpush1.msra.mxu0 0.0
        %937 = vmatprep.subr.mxu0 0.0
        %938 = vmatpush1.msra.mxu0 0.0
        %939 = vmatprep.subr.mxu0 0.0
        %940 = vmatpush1.msra.mxu0 0.0
        %941 = vmatprep.subr.mxu0 0.0
        %942 = vmatpush1.msra.mxu0 0.0
        %943 = vmatprep.subr.mxu0 0.0
        %944 = vmatpush1.msra.mxu0 %v904
        %945 = vmatprep.subr.mxu0 0.0
        %946 = vmatpush1.msra.mxu0 %v903
        %947 = vmatprep.subr.mxu0 0.0
        %948 = vmatpush1.msra.mxu0 %v902
        %949 = vmatprep.subr.mxu0 0.0
        %950 = vmatpush1.msra.mxu0 %v901
        %951 = vmatprep.subr.mxu0 0.0
        %952 = vmatpush2.msra.mxu0 0.0
        %953 = vmatprep.subr.mxu0 0.0
        %954 = vmatpush2.msra.mxu0 0.0
        %955 = vmatprep.subr.mxu0 0.0
        %956 = vmatpush2.msra.mxu0 0.0
        %957 = vmatprep.subr.mxu0 0.0
        %958 = vmatpush2.msra.mxu0 0.0
        %959 = vmatprep.subr.mxu0 0.0
        %960 = vmatpush2.msra.mxu0 0.0
        %961 = vmatprep.subr.mxu0 0.0
        %962 = vmatpush2.msra.mxu0 0.0
        %963 = vmatprep.subr.mxu0 0.0
        %964 = vmatpush2.msra.mxu0 0.0
        %965 = vmatprep.subr.mxu0 0.0
        %966 = vmatpush2.msra.mxu0 0.0
        %967 = vmatprep.subr.mxu0 0.0
        %968 = vmatpush2.msra.mxu0 0.0
        %969 = vmatprep.subr.mxu0 0.0
        %970 = vmatpush2.msra.mxu0 0.0
        %971 = vmatprep.subr.mxu0 0.0
        %972 = vmatpush2.msra.mxu0 0.0
        %973 = vmatprep.subr.mxu0 0.0
        %974 = vmatpush2.msra.mxu0 0.0
        %975 = vmatprep.subr.mxu0 0.0
        %976 = vmatpush2.msra.mxu0 0.0
        %977 = vmatprep.subr.mxu0 0.0
        %978 = vmatpush2.msra.mxu0 0.0
        %979 = vmatprep.subr.mxu0 0.0
        %980 = vmatpush2.msra.mxu0 0.0
        %981 = vmatprep.subr.mxu0 0.0
        %982 = vmatpush2.msra.mxu0 0.0
        %983 = vmatprep.mubr.f32.mxu0 0.0
        %984 = vmatmul.mubr.f32.gmra.mxu0 %v914
        %v985 = vpop.f32.mrf.mxu0
        %v986 = vadd.f32 %v910, %v985
        %v987 = vpop.f32.mrf.mxu0
        %988 = vmatprep.mubr.f32.mxu0 0.0
        %989 = vmatmul.mubr.f32.gmra.mxu0 %v917
        %v990 = vpop.f32.mrf.mxu0
        %v991 = vadd.f32 %v910, %v990
        %v992 = vpop.f32.mrf.mxu0
        %993 = vdwg.mxu0
        %995 = vrot.lane.b32.xlu0 %v986, 96
        %v996 = vpop.permute.xlu0 %995
        %vm997 = vcmask 130048
        %v998 = vsel %vm997, %v986, 0
        %v1000 = vsel %vm997, %v996, 0
        %1002 = vmatprep.subr.mxu0 0.0
        %1003 = vmatpush1.xpose.msra.mxu0 0.0
        %1004 = vmatprep.subr.mxu0 0.0
        %1005 = vmatpush1.xpose.msra.mxu0 0.0
        %1006 = vmatprep.subr.mxu0 0.0
        %1007 = vmatpush1.xpose.msra.mxu0 0.0
        %1008 = vmatprep.subr.mxu0 0.0
        %1009 = vmatpush1.xpose.msra.mxu0 0.0
        %1010 = vmatprep.subr.mxu0 0.0
        %1011 = vmatpush1.xpose.msra.mxu0 0.0
        %1012 = vmatprep.subr.mxu0 0.0
        %1013 = vmatpush1.xpose.msra.mxu0 0.0
        %1014 = vmatprep.subr.mxu0 0.0
        %1015 = vmatpush1.xpose.msra.mxu0 0.0
        %1016 = vmatprep.subr.mxu0 0.0
        %1017 = vmatpush1.xpose.msra.mxu0 0.0
        %1018 = vmatprep.subr.mxu0 0.0
        %1019 = vmatpush1.xpose.msra.mxu0 0.0
        %1020 = vmatprep.subr.mxu0 0.0
        %1021 = vmatpush1.xpose.msra.mxu0 0.0
        %1022 = vmatprep.subr.mxu0 0.0
        %1023 = vmatpush1.xpose.msra.mxu0 0.0
        %1024 = vmatprep.subr.mxu0 0.0
        %1025 = vmatpush1.xpose.msra.mxu0 0.0
        %1026 = vmatprep.subr.mxu0 0.0
        %1027 = vmatpush1.xpose.msra.mxu0 0.0
        %1028 = vmatprep.subr.mxu0 0.0
        %1029 = vmatpush1.xpose.msra.mxu0 0.0
        %1030 = vmatprep.subr.mxu0 0.0
        %1031 = vmatpush1.xpose.msra.mxu0 0.0
        %1032 = vmatprep.subr.mxu0 0.0
        %1033 = vmatpush1.xpose.msra.mxu0 %v1000
        %1034 = vmatprep.subr.mxu0 0.0
        %1035 = vmatpush2.xpose.msra.mxu0 0.0
        %1036 = vmatprep.subr.mxu0 0.0
        %1037 = vmatpush2.xpose.msra.mxu0 0.0
        %1038 = vmatprep.subr.mxu0 0.0
        %1039 = vmatpush2.xpose.msra.mxu0 0.0
        %1040 = vmatprep.subr.mxu0 0.0
        %1041 = vmatpush2.xpose.msra.mxu0 0.0
        %1042 = vmatprep.subr.mxu0 0.0
        %1043 = vmatpush2.xpose.msra.mxu0 0.0
        %1044 = vmatprep.subr.mxu0 0.0
        %1045 = vmatpush2.xpose.msra.mxu0 0.0
        %1046 = vmatprep.subr.mxu0 0.0
        %1047 = vmatpush2.xpose.msra.mxu0 0.0
        %1048 = vmatprep.subr.mxu0 0.0
        %1049 = vmatpush2.xpose.msra.mxu0 0.0
        %1050 = vmatprep.subr.mxu0 0.0
        %1051 = vmatpush2.xpose.msra.mxu0 0.0
        %1052 = vmatprep.subr.mxu0 0.0
        %1053 = vmatpush2.xpose.msra.mxu0 0.0
        %1054 = vmatprep.subr.mxu0 0.0
        %1055 = vmatpush2.xpose.msra.mxu0 0.0
        %1056 = vmatprep.subr.mxu0 0.0
        %1057 = vmatpush2.xpose.msra.mxu0 0.0
        %1058 = vmatprep.subr.mxu0 0.0
        %1059 = vmatpush2.xpose.msra.mxu0 0.0
        %1060 = vmatprep.subr.mxu0 0.0
        %1061 = vmatpush2.xpose.msra.mxu0 0.0
        %1062 = vmatprep.subr.mxu0 0.0
        %1063 = vmatpush2.xpose.msra.mxu0 0.0
        %1064 = vmatprep.subr.mxu0 0.0
        %1065 = vmatpush2.xpose.msra.mxu0 0.0
        %1066 = vmatprep.mubr.f32.mxu0 0.0
        %1067 = vmatmul.mubr.f32.gmra.mxu0 %v998
        %v1068 = vpop.f32.mrf.mxu0
        %v1069 = vadd.f32 0.0, %v1068
        %v1070 = vpop.f32.mrf.mxu0
        %1071 = vdwg.mxu0
        %v1072 = vmul.f32 %v1069, 0.25
        %v1073 = vlaneseq
        %v1074 = vshrl.u32 %v1073, 7
        %v1075 = vsub.s32 0, %v1074
        %v1076 = vrot.slane %v900, %v1075
        %v1077 = vadd.f32 %v1072, %v1076
        %vm1078 = vcmask 64512
        %v1079 = vsel %vm1078, %v1077, -inf
        %1080 = vmax.xlane.f32.xlu0 %v1079
        %v1081 = vpop.xlane.xlu0 %1080
        %v1082 = vsub.f32 %v1077, %v1081
        %v1083 = vmul.f32 %v1082, 1.442695
        %v1084 = vpow.pop %v1083
        %v1085 = vsel %vm1078, %v1084, 0.0
        %1086 = vadd.xlane.f32.xlu0 %v1085
        %v1087 = vpop.xlane.xlu0 %1086
        %v1088 = vrcp.pop %v1087
        %v1089 = vmul.f32 %v1084, %v1088
        %1090 = vrot.lane.b32.xlu0 %v986, 64
        %v1091 = vpop.permute.xlu0 %1090
        %v1094 = vsel %vm1078, %v1089, 0
        %1096 = vmatprep.subr.mxu0 0.0
        %1097 = vmatpush1.msra.mxu0 0.0
        %1098 = vmatprep.subr.mxu0 0.0
        %1099 = vmatpush1.msra.mxu0 0.0
        %1100 = vmatprep.subr.mxu0 0.0
        %1101 = vmatpush1.msra.mxu0 0.0
        %1102 = vmatprep.subr.mxu0 0.0
        %1103 = vmatpush1.msra.mxu0 0.0
        %1104 = vmatprep.subr.mxu0 0.0
        %1105 = vmatpush1.msra.mxu0 0.0
        %1106 = vmatprep.subr.mxu0 0.0
        %1107 = vmatpush1.msra.mxu0 0.0
        %1108 = vmatprep.subr.mxu0 0.0
        %1109 = vmatpush1.msra.mxu0 0.0
        %1110 = vmatprep.subr.mxu0 0.0
        %1111 = vmatpush1.msra.mxu0 0.0
        %1112 = vmatprep.subr.mxu0 0.0
        %1113 = vmatpush1.msra.mxu0 0.0
        %1114 = vmatprep.subr.mxu0 0.0
        %1115 = vmatpush1.msra.mxu0 0.0
        %1116 = vmatprep.subr.mxu0 0.0
        %1117 = vmatpush1.msra.mxu0 0.0
        %1118 = vmatprep.subr.mxu0 0.0
        %1119 = vmatpush1.msra.mxu0 0.0
        %1120 = vmatprep.subr.mxu0 0.0
        %1121 = vmatpush1.msra.mxu0 0.0
        %1122 = vmatprep.subr.mxu0 0.0
        %1123 = vmatpush1.msra.mxu0 0.0
        %1124 = vmatprep.subr.mxu0 0.0
        %1125 = vmatpush1.msra.mxu0 0.0
        %1126 = vmatprep.subr.mxu0 0.0
        %1127 = vmatpush1.msra.mxu0 %v1091
        %1128 = vmatprep.subr.mxu0 0.0
        %1129 = vmatpush2.msra.mxu0 0.0
        %1130 = vmatprep.subr.mxu0 0.0
        %1131 = vmatpush2.msra.mxu0 0.0
        %1132 = vmatprep.subr.mxu0 0.0
        %1133 = vmatpush2.msra.mxu0 0.0
        %1134 = vmatprep.subr.mxu0 0.0
        %1135 = vmatpush2.msra.mxu0 0.0
        %1136 = vmatprep.subr.mxu0 0.0
        %1137 = vmatpush2.msra.mxu0 0.0
        %1138 = vmatprep.subr.mxu0 0.0
        %1139 = vmatpush2.msra.mxu0 0.0
        %1140 = vmatprep.subr.mxu0 0.0
        %1141 = vmatpush2.msra.mxu0 0.0
        %1142 = vmatprep.subr.mxu0 0.0
        %1143 = vmatpush2.msra.mxu0 0.0
        %1144 = vmatprep.subr.mxu0 0.0
        %1145 = vmatpush2.msra.mxu0 0.0
        %1146 = vmatprep.subr.mxu0 0.0
        %1147 = vmatpush2.msra.mxu0 0.0
        %1148 = vmatprep.subr.mxu0 0.0
        %1149 = vmatpush2.msra.mxu0 0.0
        %1150 = vmatprep.subr.mxu0 0.0
        %1151 = vmatpush2.msra.mxu0 0.0
        %1152 = vmatprep.subr.mxu0 0.0
        %1153 = vmatpush2.msra.mxu0 0.0
        %1154 = vmatprep.subr.mxu0 0.0
        %1155 = vmatpush2.msra.mxu0 0.0
        %1156 = vmatprep.subr.mxu0 0.0
        %1157 = vmatpush2.msra.mxu0 0.0
        %1158 = vmatprep.subr.mxu0 0.0
        %1159 = vmatpush2.msra.mxu0 0.0
        %1160 = vmatprep.mubr.f32.mxu0 0.0
        %1161 = vmatmul.mubr.f32.gmra.mxu0 %v1094
        %v1162 = vpop.f32.mrf.mxu0
        %v1163 = vadd.f32 0.0, %v1162
        %v1164 = vpop.f32.mrf.mxu0
        %1165 = vdwg.mxu0
        %1166 = vst.msk [vmem:[#allocation3] sm:$0xff] %vm997, %v1163
        %1167 = vrot.lane.b32.xlu0 %v986, 112
        %v1168 = vpop.permute.xlu0 %1167
        %1169 = vrot.lane.b32.xlu0 %v986, 80
        %v1170 = vpop.permute.xlu0 %1169
        %v1171 = vsel %vm997, %v1168, 0
        %v1173 = vsel %vm997, %v1170, 0
        %1175 = vmatprep.subr.mxu0 0.0
        %1176 = vmatpush1.xpose.msra.mxu0 0.0
        %1177 = vmatprep.subr.mxu0 0.0
        %1178 = vmatpush1.xpose.msra.mxu0 0.0
        %1179 = vmatprep.subr.mxu0 0.0
        %1180 = vmatpush1.xpose.msra.mxu0 0.0
        %1181 = vmatprep.subr.mxu0 0.0
        %1182 = vmatpush1.xpose.msra.mxu0 0.0
        %1183 = vmatprep.subr.mxu0 0.0
        %1184 = vmatpush1.xpose.msra.mxu0 0.0
        %1185 = vmatprep.subr.mxu0 0.0
        %1186 = vmatpush1.xpose.msra.mxu0 0.0
        %1187 = vmatprep.subr.mxu0 0.0
        %1188 = vmatpush1.xpose.msra.mxu0 0.0
        %1189 = vmatprep.subr.mxu0 0.0
        %1190 = vmatpush1.xpose.msra.mxu0 0.0
        %1191 = vmatprep.subr.mxu0 0.0
        %1192 = vmatpush1.xpose.msra.mxu0 0.0
        %1193 = vmatprep.subr.mxu0 0.0
        %1194 = vmatpush1.xpose.msra.mxu0 0.0
        %1195 = vmatprep.subr.mxu0 0.0
        %1196 = vmatpush1.xpose.msra.mxu0 0.0
        %1197 = vmatprep.subr.mxu0 0.0
        %1198 = vmatpush1.xpose.msra.mxu0 0.0
        %1199 = vmatprep.subr.mxu0 0.0
        %1200 = vmatpush1.xpose.msra.mxu0 0.0
        %1201 = vmatprep.subr.mxu0 0.0
        %1202 = vmatpush1.xpose.msra.mxu0 0.0
        %1203 = vmatprep.subr.mxu0 0.0
        %1204 = vmatpush1.xpose.msra.mxu0 0.0
        %1205 = vmatprep.subr.mxu0 0.0
        %1206 = vmatpush1.xpose.msra.mxu0 %v1173
        %1207 = vmatprep.subr.mxu0 0.0
        %1208 = vmatpush2.xpose.msra.mxu0 0.0
        %1209 = vmatprep.subr.mxu0 0.0
        %1210 = vmatpush2.xpose.msra.mxu0 0.0
        %1211 = vmatprep.subr.mxu0 0.0
        %1212 = vmatpush2.xpose.msra.mxu0 0.0
        %1213 = vmatprep.subr.mxu0 0.0
        %1214 = vmatpush2.xpose.msra.mxu0 0.0
        %1215 = vmatprep.subr.mxu0 0.0
        %1216 = vmatpush2.xpose.msra.mxu0 0.0
        %1217 = vmatprep.subr.mxu0 0.0
        %1218 = vmatpush2.xpose.msra.mxu0 0.0
        %1219 = vmatprep.subr.mxu0 0.0
        %1220 = vmatpush2.xpose.msra.mxu0 0.0
        %1221 = vmatprep.subr.mxu0 0.0
        %1222 = vmatpush2.xpose.msra.mxu0 0.0
        %1223 = vmatprep.subr.mxu0 0.0
        %1224 = vmatpush2.xpose.msra.mxu0 0.0
        %1225 = vmatprep.subr.mxu0 0.0
        %1226 = vmatpush2.xpose.msra.mxu0 0.0
        %1227 = vmatprep.subr.mxu0 0.0
        %1228 = vmatpush2.xpose.msra.mxu0 0.0
        %1229 = vmatprep.subr.mxu0 0.0
        %1230 = vmatpush2.xpose.msra.mxu0 0.0
        %1231 = vmatprep.subr.mxu0 0.0
        %1232 = vmatpush2.xpose.msra.mxu0 0.0
        %1233 = vmatprep.subr.mxu0 0.0
        %1234 = vmatpush2.xpose.msra.mxu0 0.0
        %1235 = vmatprep.subr.mxu0 0.0
        %1236 = vmatpush2.xpose.msra.mxu0 0.0
        %1237 = vmatprep.subr.mxu0 0.0
        %1238 = vmatpush2.xpose.msra.mxu0 0.0
        %1239 = vmatprep.mubr.f32.mxu0 0.0
        %1240 = vmatmul.mubr.f32.gmra.mxu0 %v1171
        %v1241 = vpop.f32.mrf.mxu0
        %v1242 = vadd.f32 0.0, %v1241
        %v1243 = vpop.f32.mrf.mxu0
        %1244 = vdwg.mxu0
        %v1245 = vmul.f32 %v1242, 0.25
        %v1246 = vadd.f32 %v1245, %v1076
        %v1247 = vsel %vm1078, %v1246, -inf
        %1248 = vmax.xlane.f32.xlu0 %v1247
        %v1249 = vpop.xlane.xlu0 %1248
        %v1250 = vsub.f32 %v1246, %v1249
        %v1251 = vmul.f32 %v1250, 1.442695
        %v1252 = vpow.pop %v1251
        %v1253 = vsel %vm1078, %v1252, 0.0
        %1254 = vadd.xlane.f32.xlu0 %v1253
        %v1255 = vpop.xlane.xlu0 %1254
        %v1256 = vrcp.pop %v1255
        %v1257 = vmul.f32 %v1252, %v1256
        %1258 = vrot.lane.b32.xlu0 %v986, 48
        %v1259 = vpop.permute.xlu0 %1258
        %v1262 = vsel %vm1078, %v1257, 0
        %1264 = vmatprep.subr.mxu0 0.0
        %1265 = vmatpush1.msra.mxu0 0.0
        %1266 = vmatprep.subr.mxu0 0.0
        %1267 = vmatpush1.msra.mxu0 0.0
        %1268 = vmatprep.subr.mxu0 0.0
        %1269 = vmatpush1.msra.mxu0 0.0
        %1270 = vmatprep.subr.mxu0 0.0
        %1271 = vmatpush1.msra.mxu0 0.0
        %1272 = vmatprep.subr.mxu0 0.0
        %1273 = vmatpush1.msra.mxu0 0.0
        %1274 = vmatprep.subr.mxu0 0.0
        %1275 = vmatpush1.msra.mxu0 0.0
        %1276 = vmatprep.subr.mxu0 0.0
        %1277 = vmatpush1.msra.mxu0 0.0
        %1278 = vmatprep.subr.mxu0 0.0
        %1279 = vmatpush1.msra.mxu0 0.0
        %1280 = vmatprep.subr.mxu0 0.0
        %1281 = vmatpush1.msra.mxu0 0.0
        %1282 = vmatprep.subr.mxu0 0.0
        %1283 = vmatpush1.msra.mxu0 0.0
        %1284 = vmatprep.subr.mxu0 0.0
        %1285 = vmatpush1.msra.mxu0 0.0
        %1286 = vmatprep.subr.mxu0 0.0
        %1287 = vmatpush1.msra.mxu0 0.0
        %1288 = vmatprep.subr.mxu0 0.0
        %1289 = vmatpush1.msra.mxu0 0.0
        %1290 = vmatprep.subr.mxu0 0.0
        %1291 = vmatpush1.msra.mxu0 0.0
        %1292 = vmatprep.subr.mxu0 0.0
        %1293 = vmatpush1.msra.mxu0 0.0
        %1294 = vmatprep.subr.mxu0 0.0
        %1295 = vmatpush1.msra.mxu0 %v1259
        %1296 = vmatprep.subr.mxu0 0.0
        %1297 = vmatpush2.msra.mxu0 0.0
        %1298 = vmatprep.subr.mxu0 0.0
        %1299 = vmatpush2.msra.mxu0 0.0
        %1300 = vmatprep.subr.mxu0 0.0
        %1301 = vmatpush2.msra.mxu0 0.0
        %1302 = vmatprep.subr.mxu0 0.0
        %1303 = vmatpush2.msra.mxu0 0.0
        %1304 = vmatprep.subr.mxu0 0.0
        %1305 = vmatpush2.msra.mxu0 0.0
        %1306 = vmatprep.subr.mxu0 0.0
        %1307 = vmatpush2.msra.mxu0 0.0
        %1308 = vmatprep.subr.mxu0 0.0
        %1309 = vmatpush2.msra.mxu0 0.0
        %1310 = vmatprep.subr.mxu0 0.0
        %1311 = vmatpush2.msra.mxu0 0.0
        %1312 = vmatprep.subr.mxu0 0.0
        %1313 = vmatpush2.msra.mxu0 0.0
        %1314 = vmatprep.subr.mxu0 0.0
        %1315 = vmatpush2.msra.mxu0 0.0
        %1316 = vmatprep.subr.mxu0 0.0
        %1317 = vmatpush2.msra.mxu0 0.0
        %1318 = vmatprep.subr.mxu0 0.0
        %1319 = vmatpush2.msra.mxu0 0.0
        %1320 = vmatprep.subr.mxu0 0.0
        %1321 = vmatpush2.msra.mxu0 0.0
        %1322 = vmatprep.subr.mxu0 0.0
        %1323 = vmatpush2.msra.mxu0 0.0
        %1324 = vmatprep.subr.mxu0 0.0
        %1325 = vmatpush2.msra.mxu0 0.0
        %1326 = vmatprep.subr.mxu0 0.0
        %1327 = vmatpush2.msra.mxu0 0.0
        %1328 = vmatprep.mubr.f32.mxu0 0.0
        %1329 = vmatmul.mubr.f32.gmra.mxu0 %v1262
        %v1330 = vpop.f32.mrf.mxu0
        %v1331 = vadd.f32 0.0, %v1330
        %v1332 = vpop.f32.mrf.mxu0
        %1333 = vdwg.mxu0
        %1335 = vrot.lane.b32.xlu0 %v1331, 16
        %v1336 = vpop.permute.xlu0 %1335
        %vm1338 = vcmask 261248
        %1339 = vst.msk [vmem:[#allocation3] sm:$0xff] %vm1338, %v1336
        %1341 = vrot.lane.b32.xlu0 %v991, 96
        %v1342 = vpop.permute.xlu0 %1341
        %v1343 = vsel %vm997, %v991, 0
        %v1345 = vsel %vm997, %v1342, 0
        %1347 = vmatprep.subr.mxu0 0.0
        %1348 = vmatpush1.xpose.msra.mxu0 0.0
        %1349 = vmatprep.subr.mxu0 0.0
        %1350 = vmatpush1.xpose.msra.mxu0 0.0
        %1351 = vmatprep.subr.mxu0 0.0
        %1352 = vmatpush1.xpose.msra.mxu0 0.0
        %1353 = vmatprep.subr.mxu0 0.0
        %1354 = vmatpush1.xpose.msra.mxu0 0.0
        %1355 = vmatprep.subr.mxu0 0.0
        %1356 = vmatpush1.xpose.msra.mxu0 0.0
        %1357 = vmatprep.subr.mxu0 0.0
        %1358 = vmatpush1.xpose.msra.mxu0 0.0
        %1359 = vmatprep.subr.mxu0 0.0
        %1360 = vmatpush1.xpose.msra.mxu0 0.0
        %1361 = vmatprep.subr.mxu0 0.0
        %1362 = vmatpush1.xpose.msra.mxu0 0.0
        %1363 = vmatprep.subr.mxu0 0.0
        %1364 = vmatpush1.xpose.msra.mxu0 0.0
        %1365 = vmatprep.subr.mxu0 0.0
        %1366 = vmatpush1.xpose.msra.mxu0 0.0
        %1367 = vmatprep.subr.mxu0 0.0
        %1368 = vmatpush1.xpose.msra.mxu0 0.0
        %1369 = vmatprep.subr.mxu0 0.0
        %1370 = vmatpush1.xpose.msra.mxu0 0.0
        %1371 = vmatprep.subr.mxu0 0.0
        %1372 = vmatpush1.xpose.msra.mxu0 0.0
        %1373 = vmatprep.subr.mxu0 0.0
        %1374 = vmatpush1.xpose.msra.mxu0 0.0
        %1375 = vmatprep.subr.mxu0 0.0
        %1376 = vmatpush1.xpose.msra.mxu0 0.0
        %1377 = vmatprep.subr.mxu0 0.0
        %1378 = vmatpush1.xpose.msra.mxu0 %v1345
        %1379 = vmatprep.subr.mxu0 0.0
        %1380 = vmatpush2.xpose.msra.mxu0 0.0
        %1381 = vmatprep.subr.mxu0 0.0
        %1382 = vmatpush2.xpose.msra.mxu0 0.0
        %1383 = vmatprep.subr.mxu0 0.0
        %1384 = vmatpush2.xpose.msra.mxu0 0.0
        %1385 = vmatprep.subr.mxu0 0.0
        %1386 = vmatpush2.xpose.msra.mxu0 0.0
        %1387 = vmatprep.subr.mxu0 0.0
        %1388 = vmatpush2.xpose.msra.mxu0 0.0
        %1389 = vmatprep.subr.mxu0 0.0
        %1390 = vmatpush2.xpose.msra.mxu0 0.0
        %1391 = vmatprep.subr.mxu0 0.0
        %1392 = vmatpush2.xpose.msra.mxu0 0.0
        %1393 = vmatprep.subr.mxu0 0.0
        %1394 = vmatpush2.xpose.msra.mxu0 0.0
        %1395 = vmatprep.subr.mxu0 0.0
        %1396 = vmatpush2.xpose.msra.mxu0 0.0
        %1397 = vmatprep.subr.mxu0 0.0
        %1398 = vmatpush2.xpose.msra.mxu0 0.0
        %1399 = vmatprep.subr.mxu0 0.0
        %1400 = vmatpush2.xpose.msra.mxu0 0.0
        %1401 = vmatprep.subr.mxu0 0.0
        %1402 = vmatpush2.xpose.msra.mxu0 0.0
        %1403 = vmatprep.subr.mxu0 0.0
        %1404 = vmatpush2.xpose.msra.mxu0 0.0
        %1405 = vmatprep.subr.mxu0 0.0
        %1406 = vmatpush2.xpose.msra.mxu0 0.0
        %1407 = vmatprep.subr.mxu0 0.0
        %1408 = vmatpush2.xpose.msra.mxu0 0.0
        %1409 = vmatprep.subr.mxu0 0.0
        %1410 = vmatpush2.xpose.msra.mxu0 0.0
        %1411 = vmatprep.mubr.f32.mxu0 0.0
        %1412 = vmatmul.mubr.f32.gmra.mxu0 %v1343
        %v1413 = vpop.f32.mrf.mxu0
        %v1414 = vadd.f32 0.0, %v1413
        %v1415 = vpop.f32.mrf.mxu0
        %1416 = vdwg.mxu0
        %v1417 = vmul.f32 %v1414, 0.25
        %v1418 = vlaneseq
        %v1419 = vshrl.u32 %v1418, 7
        %v1420 = vsub.s32 1, %v1419
        %v1421 = vrot.slane %v900, %v1420
        %v1422 = vadd.f32 %v1417, %v1421
        %v1423 = vsel %vm1078, %v1422, -inf
        %1424 = vmax.xlane.f32.xlu0 %v1423
        %v1425 = vpop.xlane.xlu0 %1424
        %v1426 = vsub.f32 %v1422, %v1425
        %v1427 = vmul.f32 %v1426, 1.442695
        %v1428 = vpow.pop %v1427
        %v1429 = vsel %vm1078, %v1428, 0.0
        %1430 = vadd.xlane.f32.xlu0 %v1429
        %v1431 = vpop.xlane.xlu0 %1430
        %v1432 = vrcp.pop %v1431
        %v1433 = vmul.f32 %v1428, %v1432
        %1434 = vrot.lane.b32.xlu0 %v991, 64
        %v1435 = vpop.permute.xlu0 %1434
        %v1438 = vsel %vm1078, %v1433, 0
        %1440 = vmatprep.subr.mxu0 0.0
        %1441 = vmatpush1.msra.mxu0 0.0
        %1442 = vmatprep.subr.mxu0 0.0
        %1443 = vmatpush1.msra.mxu0 0.0
        %1444 = vmatprep.subr.mxu0 0.0
        %1445 = vmatpush1.msra.mxu0 0.0
        %1446 = vmatprep.subr.mxu0 0.0
        %1447 = vmatpush1.msra.mxu0 0.0
        %1448 = vmatprep.subr.mxu0 0.0
        %1449 = vmatpush1.msra.mxu0 0.0
        %1450 = vmatprep.subr.mxu0 0.0
        %1451 = vmatpush1.msra.mxu0 0.0
        %1452 = vmatprep.subr.mxu0 0.0
        %1453 = vmatpush1.msra.mxu0 0.0
        %1454 = vmatprep.subr.mxu0 0.0
        %1455 = vmatpush1.msra.mxu0 0.0
        %1456 = vmatprep.subr.mxu0 0.0
        %1457 = vmatpush1.msra.mxu0 0.0
        %1458 = vmatprep.subr.mxu0 0.0
        %1459 = vmatpush1.msra.mxu0 0.0
        %1460 = vmatprep.subr.mxu0 0.0
        %1461 = vmatpush1.msra.mxu0 0.0
        %1462 = vmatprep.subr.mxu0 0.0
        %1463 = vmatpush1.msra.mxu0 0.0
        %1464 = vmatprep.subr.mxu0 0.0
        %1465 = vmatpush1.msra.mxu0 0.0
        %1466 = vmatprep.subr.mxu0 0.0
        %1467 = vmatpush1.msra.mxu0 0.0
        %1468 = vmatprep.subr.mxu0 0.0
        %1469 = vmatpush1.msra.mxu0 0.0
        %1470 = vmatprep.subr.mxu0 0.0
        %1471 = vmatpush1.msra.mxu0 %v1435
        %1472 = vmatprep.subr.mxu0 0.0
        %1473 = vmatpush2.msra.mxu0 0.0
        %1474 = vmatprep.subr.mxu0 0.0
        %1475 = vmatpush2.msra.mxu0 0.0
        %1476 = vmatprep.subr.mxu0 0.0
        %1477 = vmatpush2.msra.mxu0 0.0
        %1478 = vmatprep.subr.mxu0 0.0
        %1479 = vmatpush2.msra.mxu0 0.0
        %1480 = vmatprep.subr.mxu0 0.0
        %1481 = vmatpush2.msra.mxu0 0.0
        %1482 = vmatprep.subr.mxu0 0.0
        %1483 = vmatpush2.msra.mxu0 0.0
        %1484 = vmatprep.subr.mxu0 0.0
        %1485 = vmatpush2.msra.mxu0 0.0
        %1486 = vmatprep.subr.mxu0 0.0
        %1487 = vmatpush2.msra.mxu0 0.0
        %1488 = vmatprep.subr.mxu0 0.0
        %1489 = vmatpush2.msra.mxu0 0.0
        %1490 = vmatprep.subr.mxu0 0.0
        %1491 = vmatpush2.msra.mxu0 0.0
        %1492 = vmatprep.subr.mxu0 0.0
        %1493 = vmatpush2.msra.mxu0 0.0
        %1494 = vmatprep.subr.mxu0 0.0
        %1495 = vmatpush2.msra.mxu0 0.0
        %1496 = vmatprep.subr.mxu0 0.0
        %1497 = vmatpush2.msra.mxu0 0.0
        %1498 = vmatprep.subr.mxu0 0.0
        %1499 = vmatpush2.msra.mxu0 0.0
        %1500 = vmatprep.subr.mxu0 0.0
        %1501 = vmatpush2.msra.mxu0 0.0
        %1502 = vmatprep.subr.mxu0 0.0
        %1503 = vmatpush2.msra.mxu0 0.0
        %1504 = vmatprep.mubr.f32.mxu0 0.0
        %1505 = vmatmul.mubr.f32.gmra.mxu0 %v1438
        %v1506 = vpop.f32.mrf.mxu0
        %v1507 = vadd.f32 0.0, %v1506
        %v1508 = vpop.f32.mrf.mxu0
        %1509 = vdwg.mxu0
        %1510 = vst.msk [vmem:[#allocation3 + $0x8] sm:$0xff] %vm997, %v1507
        %1511 = vrot.lane.b32.xlu0 %v991, 112
        %v1512 = vpop.permute.xlu0 %1511
        %1513 = vrot.lane.b32.xlu0 %v991, 80
        %v1514 = vpop.permute.xlu0 %1513
        %v1515 = vsel %vm997, %v1512, 0
        %v1517 = vsel %vm997, %v1514, 0
        %1519 = vmatprep.subr.mxu0 0.0
        %1520 = vmatpush1.xpose.msra.mxu0 0.0
        %1521 = vmatprep.subr.mxu0 0.0
        %1522 = vmatpush1.xpose.msra.mxu0 0.0
        %1523 = vmatprep.subr.mxu0 0.0
        %1524 = vmatpush1.xpose.msra.mxu0 0.0
        %1525 = vmatprep.subr.mxu0 0.0
        %1526 = vmatpush1.xpose.msra.mxu0 0.0
        %1527 = vmatprep.subr.mxu0 0.0
        %1528 = vmatpush1.xpose.msra.mxu0 0.0
        %1529 = vmatprep.subr.mxu0 0.0
        %1530 = vmatpush1.xpose.msra.mxu0 0.0
        %1531 = vmatprep.subr.mxu0 0.0
        %1532 = vmatpush1.xpose.msra.mxu0 0.0
        %1533 = vmatprep.subr.mxu0 0.0
        %1534 = vmatpush1.xpose.msra.mxu0 0.0
        %1535 = vmatprep.subr.mxu0 0.0
        %1536 = vmatpush1.xpose.msra.mxu0 0.0
        %1537 = vmatprep.subr.mxu0 0.0
        %1538 = vmatpush1.xpose.msra.mxu0 0.0
        %1539 = vmatprep.subr.mxu0 0.0
        %1540 = vmatpush1.xpose.msra.mxu0 0.0
        %1541 = vmatprep.subr.mxu0 0.0
        %1542 = vmatpush1.xpose.msra.mxu0 0.0
        %1543 = vmatprep.subr.mxu0 0.0
        %1544 = vmatpush1.xpose.msra.mxu0 0.0
        %1545 = vmatprep.subr.mxu0 0.0
        %1546 = vmatpush1.xpose.msra.mxu0 0.0
        %1547 = vmatprep.subr.mxu0 0.0
        %1548 = vmatpush1.xpose.msra.mxu0 0.0
        %1549 = vmatprep.subr.mxu0 0.0
        %1550 = vmatpush1.xpose.msra.mxu0 %v1517
        %1551 = vmatprep.subr.mxu0 0.0
        %1552 = vmatpush2.xpose.msra.mxu0 0.0
        %1553 = vmatprep.subr.mxu0 0.0
        %1554 = vmatpush2.xpose.msra.mxu0 0.0
        %1555 = vmatprep.subr.mxu0 0.0
        %1556 = vmatpush2.xpose.msra.mxu0 0.0
        %1557 = vmatprep.subr.mxu0 0.0
        %1558 = vmatpush2.xpose.msra.mxu0 0.0
        %1559 = vmatprep.subr.mxu0 0.0
        %1560 = vmatpush2.xpose.msra.mxu0 0.0
        %1561 = vmatprep.subr.mxu0 0.0
        %1562 = vmatpush2.xpose.msra.mxu0 0.0
        %1563 = vmatprep.subr.mxu0 0.0
        %1564 = vmatpush2.xpose.msra.mxu0 0.0
        %1565 = vmatprep.subr.mxu0 0.0
        %1566 = vmatpush2.xpose.msra.mxu0 0.0
        %1567 = vmatprep.subr.mxu0 0.0
        %1568 = vmatpush2.xpose.msra.mxu0 0.0
        %1569 = vmatprep.subr.mxu0 0.0
        %1570 = vmatpush2.xpose.msra.mxu0 0.0
        %1571 = vmatprep.subr.mxu0 0.0
        %1572 = vmatpush2.xpose.msra.mxu0 0.0
        %1573 = vmatprep.subr.mxu0 0.0
        %1574 = vmatpush2.xpose.msra.mxu0 0.0
        %1575 = vmatprep.subr.mxu0 0.0
        %1576 = vmatpush2.xpose.msra.mxu0 0.0
        %1577 = vmatprep.subr.mxu0 0.0
        %1578 = vmatpush2.xpose.msra.mxu0 0.0
        %1579 = vmatprep.subr.mxu0 0.0
        %1580 = vmatpush2.xpose.msra.mxu0 0.0
        %1581 = vmatprep.subr.mxu0 0.0
        %1582 = vmatpush2.xpose.msra.mxu0 0.0
        %1583 = vmatprep.mubr.f32.mxu0 0.0
        %1584 = vmatmul.mubr.f32.gmra.mxu0 %v1515
        %v1585 = vpop.f32.mrf.mxu0
        %v1586 = vadd.f32 0.0, %v1585
        %v1587 = vpop.f32.mrf.mxu0
        %1588 = vdwg.mxu0
        %v1589 = vmul.f32 %v1586, 0.25
        %v1590 = vadd.f32 %v1589, %v1421
        %v1591 = vsel %vm1078, %v1590, -inf
        %1592 = vmax.xlane.f32.xlu0 %v1591
        %v1593 = vpop.xlane.xlu0 %1592
        %v1594 = vsub.f32 %v1590, %v1593
        %v1595 = vmul.f32 %v1594, 1.442695
        %v1596 = vpow.pop %v1595
        %v1597 = vsel %vm1078, %v1596, 0.0
        %1598 = vadd.xlane.f32.xlu0 %v1597
        %v1599 = vpop.xlane.xlu0 %1598
        %v1600 = vrcp.pop %v1599
        %v1601 = vmul.f32 %v1596, %v1600
        %1602 = vrot.lane.b32.xlu0 %v991, 48
        %v1603 = vpop.permute.xlu0 %1602
        %v1606 = vsel %vm1078, %v1601, 0
        %1608 = vmatprep.subr.mxu0 0.0
        %1609 = vmatpush1.msra.mxu0 0.0
        %1610 = vmatprep.subr.mxu0 0.0
        %1611 = vmatpush1.msra.mxu0 0.0
        %1612 = vmatprep.subr.mxu0 0.0
        %1613 = vmatpush1.msra.mxu0 0.0
        %1614 = vmatprep.subr.mxu0 0.0
        %1615 = vmatpush1.msra.mxu0 0.0
        %1616 = vmatprep.subr.mxu0 0.0
        %1617 = vmatpush1.msra.mxu0 0.0
        %1618 = vmatprep.subr.mxu0 0.0
        %1619 = vmatpush1.msra.mxu0 0.0
        %1620 = vmatprep.subr.mxu0 0.0
        %1621 = vmatpush1.msra.mxu0 0.0
        %1622 = vmatprep.subr.mxu0 0.0
        %1623 = vmatpush1.msra.mxu0 0.0
        %1624 = vmatprep.subr.mxu0 0.0
        %1625 = vmatpush1.msra.mxu0 0.0
        %1626 = vmatprep.subr.mxu0 0.0
        %1627 = vmatpush1.msra.mxu0 0.0
        %1628 = vmatprep.subr.mxu0 0.0
        %1629 = vmatpush1.msra.mxu0 0.0
        %1630 = vmatprep.subr.mxu0 0.0
        %1631 = vmatpush1.msra.mxu0 0.0
        %1632 = vmatprep.subr.mxu0 0.0
        %1633 = vmatpush1.msra.mxu0 0.0
        %1634 = vmatprep.subr.mxu0 0.0
        %1635 = vmatpush1.msra.mxu0 0.0
        %1636 = vmatprep.subr.mxu0 0.0
        %1637 = vmatpush1.msra.mxu0 0.0
        %1638 = vmatprep.subr.mxu0 0.0
        %1639 = vmatpush1.msra.mxu0 %v1603
        %1640 = vmatprep.subr.mxu0 0.0
        %1641 = vmatpush2.msra.mxu0 0.0
        %1642 = vmatprep.subr.mxu0 0.0
        %1643 = vmatpush2.msra.mxu0 0.0
        %1644 = vmatprep.subr.mxu0 0.0
        %1645 = vmatpush2.msra.mxu0 0.0
        %1646 = vmatprep.subr.mxu0 0.0
        %1647 = vmatpush2.msra.mxu0 0.0
        %1648 = vmatprep.subr.mxu0 0.0
        %1649 = vmatpush2.msra.mxu0 0.0
        %1650 = vmatprep.subr.mxu0 0.0
        %1651 = vmatpush2.msra.mxu0 0.0
        %1652 = vmatprep.subr.mxu0 0.0
        %1653 = vmatpush2.msra.mxu0 0.0
        %1654 = vmatprep.subr.mxu0 0.0
        %1655 = vmatpush2.msra.mxu0 0.0
        %1656 = vmatprep.subr.mxu0 0.0
        %1657 = vmatpush2.msra.mxu0 0.0
        %1658 = vmatprep.subr.mxu0 0.0
        %1659 = vmatpush2.msra.mxu0 0.0
        %1660 = vmatprep.subr.mxu0 0.0
        %1661 = vmatpush2.msra.mxu0 0.0
        %1662 = vmatprep.subr.mxu0 0.0
        %1663 = vmatpush2.msra.mxu0 0.0
        %1664 = vmatprep.subr.mxu0 0.0
        %1665 = vmatpush2.msra.mxu0 0.0
        %1666 = vmatprep.subr.mxu0 0.0
        %1667 = vmatpush2.msra.mxu0 0.0
        %1668 = vmatprep.subr.mxu0 0.0
        %1669 = vmatpush2.msra.mxu0 0.0
        %1670 = vmatprep.subr.mxu0 0.0
        %1671 = vmatpush2.msra.mxu0 0.0
        %1672 = vmatprep.mubr.f32.mxu0 0.0
        %1673 = vmatmul.mubr.f32.gmra.mxu0 %v1606
        %v1674 = vpop.f32.mrf.mxu0
        %v1675 = vadd.f32 0.0, %v1674
        %v1676 = vpop.f32.mrf.mxu0
        %1677 = vdwg.mxu0
        %1679 = vrot.lane.b32.xlu0 %v1675, 16
        %v1680 = vpop.permute.xlu0 %1679
        %1682 = vst.msk [vmem:[#allocation3 + $0x8] sm:$0xff] %vm1338, %v1680
        %v1683 = vld [vmem:[#allocation3] sm:$0xff]
        %v1684 = vld [vmem:[#allocation3 + $0x8] sm:$0xff]
        %v1685 = vld [vmem:[%s831] sm:$0xff]
        %v1686 = vld [vmem:[%s831 + $0x8] sm:$0xff]
        %v1687 = vld [vmem:[%s831 + $0x10] sm:$0xff]
        %v1688 = vld [vmem:[%s831 + $0x18] sm:$0xff]
        %v1689 = vld [vmem:[%s683] sm:$0x1]
        %v1691 = vlaneseq
        %v1692 = vshrl.u32 %v1691, 7
        %v1693 = vsub.s32 0, %v1692
        %v1694 = vrot.slane %v1689, %v1693
        %v1697 = vsel %vm912, %v1683, 0
        %v1700 = vsel %vm912, %v1684, 0
        %1702 = vmatprep.subr.mxu0 0.0
        %1703 = vmatpush1.msra.mxu0 0.0
        %1704 = vmatprep.subr.mxu0 0.0
        %1705 = vmatpush1.msra.mxu0 0.0
        %1706 = vmatprep.subr.mxu0 0.0
        %1707 = vmatpush1.msra.mxu0 0.0
        %1708 = vmatprep.subr.mxu0 0.0
        %1709 = vmatpush1.msra.mxu0 0.0
        %1710 = vmatprep.subr.mxu0 0.0
        %1711 = vmatpush1.msra.mxu0 0.0
        %1712 = vmatprep.subr.mxu0 0.0
        %1713 = vmatpush1.msra.mxu0 0.0
        %1714 = vmatprep.subr.mxu0 0.0
        %1715 = vmatpush1.msra.mxu0 0.0
        %1716 = vmatprep.subr.mxu0 0.0
        %1717 = vmatpush1.msra.mxu0 0.0
        %1718 = vmatprep.subr.mxu0 0.0
        %1719 = vmatpush1.msra.mxu0 0.0
        %1720 = vmatprep.subr.mxu0 0.0
        %1721 = vmatpush1.msra.mxu0 0.0
        %1722 = vmatprep.subr.mxu0 0.0
        %1723 = vmatpush1.msra.mxu0 0.0
        %1724 = vmatprep.subr.mxu0 0.0
        %1725 = vmatpush1.msra.mxu0 0.0
        %1726 = vmatprep.subr.mxu0 0.0
        %1727 = vmatpush1.msra.mxu0 %v1688
        %1728 = vmatprep.subr.mxu0 0.0
        %1729 = vmatpush1.msra.mxu0 %v1687
        %1730 = vmatprep.subr.mxu0 0.0
        %1731 = vmatpush1.msra.mxu0 %v1686
        %1732 = vmatprep.subr.mxu0 0.0
        %1733 = vmatpush1.msra.mxu0 %v1685
        %1734 = vmatprep.subr.mxu0 0.0
        %1735 = vmatpush2.msra.mxu0 0.0
        %1736 = vmatprep.subr.mxu0 0.0
        %1737 = vmatpush2.msra.mxu0 0.0
        %1738 = vmatprep.subr.mxu0 0.0
        %1739 = vmatpush2.msra.mxu0 0.0
        %1740 = vmatprep.subr.mxu0 0.0
        %1741 = vmatpush2.msra.mxu0 0.0
        %1742 = vmatprep.subr.mxu0 0.0
        %1743 = vmatpush2.msra.mxu0 0.0
        %1744 = vmatprep.subr.mxu0 0.0
        %1745 = vmatpush2.msra.mxu0 0.0
        %1746 = vmatprep.subr.mxu0 0.0
        %1747 = vmatpush2.msra.mxu0 0.0
        %1748 = vmatprep.subr.mxu0 0.0
        %1749 = vmatpush2.msra.mxu0 0.0
        %1750 = vmatprep.subr.mxu0 0.0
        %1751 = vmatpush2.msra.mxu0 0.0
        %1752 = vmatprep.subr.mxu0 0.0
        %1753 = vmatpush2.msra.mxu0 0.0
        %1754 = vmatprep.subr.mxu0 0.0
        %1755 = vmatpush2.msra.mxu0 0.0
        %1756 = vmatprep.subr.mxu0 0.0
        %1757 = vmatpush2.msra.mxu0 0.0
        %1758 = vmatprep.subr.mxu0 0.0
        %1759 = vmatpush2.msra.mxu0 0.0
        %1760 = vmatprep.subr.mxu0 0.0
        %1761 = vmatpush2.msra.mxu0 0.0
        %1762 = vmatprep.subr.mxu0 0.0
        %1763 = vmatpush2.msra.mxu0 0.0
        %1764 = vmatprep.subr.mxu0 0.0
        %1765 = vmatpush2.msra.mxu0 0.0
        %1766 = vmatprep.mubr.f32.mxu0 0.0
        %1767 = vmatmul.mubr.f32.gmra.mxu0 %v1697
        %v1768 = vpop.f32.mrf.mxu0
        %v1769 = vadd.f32 %v1694, %v1768
        %v1770 = vpop.f32.mrf.mxu0
        %1771 = vmatprep.mubr.f32.mxu0 0.0
        %1772 = vmatmul.mubr.f32.gmra.mxu0 %v1700
        %v1773 = vpop.f32.mrf.mxu0
        %v1774 = vadd.f32 %v1694, %v1773
        %v1775 = vpop.f32.mrf.mxu0
        %1776 = vdwg.mxu0
        %v1777 = vadd.f32 %v898, %v1769
        %v1778 = vadd.f32 %v899, %v1774
        %v1779 = vld [vmem:[%s691] sm:$0x1]
        %v1780 = vld [vmem:[%s699] sm:$0x1]
        %v1781 = vsel %vm912, %v1777, 0.0
        %1782 = vadd.xlane.f32.xlu0 %v1781
        %v1783 = vpop.xlane.xlu0 %1782
        %v1784 = vsel %vm912, %v1778, 0.0
        %1785 = vadd.xlane.f32.xlu0 %v1784
        %v1786 = vpop.xlane.xlu0 %1785
        %v1787 = vrcp.pop 32.0
        %v1788 = vmul.f32 %v1783, %v1787
        %v1789 = vmul.f32 %v1786, %v1787
        %v1790 = vsub.f32 %v1777, %v1788
        %v1791 = vsub.f32 %v1778, %v1789
        %v1792 = vmul.f32 %v1790, %v1790
        %v1793 = vmul.f32 %v1791, %v1791
        %v1794 = vsel %vm912, %v1792, 0.0
        %1795 = vadd.xlane.f32.xlu0 %v1794
        %v1796 = vpop.xlane.xlu0 %1795
        %v1797 = vsel %vm912, %v1793, 0.0
        %1798 = vadd.xlane.f32.xlu0 %v1797
        %v1799 = vpop.xlane.xlu0 %1798
        %v1800 = vmul.f32 %v1796, %v1787
        %v1801 = vmul.f32 %v1799, %v1787
        %v1802 = vadd.f32 %v1800, 1e-12
        %v1803 = vadd.f32 %v1801, 1e-12
        %v1804 = vrsqrt.pop %v1802
        %v1805 = vrsqrt.pop %v1803
        %v1806 = vmul.f32 %v1790, %v1804
        %v1807 = vmul.f32 %v1791, %v1805
        %v1809 = vlaneseq
        %v1810 = vshrl.u32 %v1809, 7
        %v1811 = vsub.s32 0, %v1810
        %v1812 = vrot.slane %v1779, %v1811
        %v1814 = vmul.f32 %v1806, %v1812
        %v1815 = vmul.f32 %v1807, %v1812
        %v1817 = vlaneseq
        %v1818 = vshrl.u32 %v1817, 7
        %v1819 = vsub.s32 0, %v1818
        %v1820 = vrot.slane %v1780, %v1819
        %v1822 = vadd.f32 %v1814, %v1820
        %v1823 = vadd.f32 %v1815, %v1820
        %v1824 = vld [vmem:[%s836] sm:$0xff]
        %v1825 = vld [vmem:[%s836 + $0x8] sm:$0xff]
        %v1826 = vld [vmem:[%s836 + $0x10] sm:$0xff]
        %v1827 = vld [vmem:[%s836 + $0x18] sm:$0xff]
        %v1828 = vld [vmem:[%s707] sm:$0x1]
        %v1830 = vlaneseq
        %v1831 = vshrl.u32 %v1830, 7
        %v1832 = vsub.s32 0, %v1831
        %v1833 = vrot.slane %v1828, %v1832
        %v1836 = vsel %vm912, %v1822, 0
        %v1839 = vsel %vm912, %v1823, 0
        %1841 = vmatprep.subr.mxu0 0.0
        %1842 = vmatpush1.msra.mxu0 0.0
        %1843 = vmatprep.subr.mxu0 0.0
        %1844 = vmatpush1.msra.mxu0 0.0
        %1845 = vmatprep.subr.mxu0 0.0
        %1846 = vmatpush1.msra.mxu0 0.0
        %1847 = vmatprep.subr.mxu0 0.0
        %1848 = vmatpush1.msra.mxu0 0.0
        %1849 = vmatprep.subr.mxu0 0.0
        %1850 = vmatpush1.msra.mxu0 0.0
        %1851 = vmatprep.subr.mxu0 0.0
        %1852 = vmatpush1.msra.mxu0 0.0
        %1853 = vmatprep.subr.mxu0 0.0
        %1854 = vmatpush1.msra.mxu0 0.0
        %1855 = vmatprep.subr.mxu0 0.0
        %1856 = vmatpush1.msra.mxu0 0.0
        %1857 = vmatprep.subr.mxu0 0.0
        %1858 = vmatpush1.msra.mxu0 0.0
        %1859 = vmatprep.subr.mxu0 0.0
        %1860 = vmatpush1.msra.mxu0 0.0
        %1861 = vmatprep.subr.mxu0 0.0
        %1862 = vmatpush1.msra.mxu0 0.0
        %1863 = vmatprep.subr.mxu0 0.0
        %1864 = vmatpush1.msra.mxu0 0.0
        %1865 = vmatprep.subr.mxu0 0.0
        %1866 = vmatpush1.msra.mxu0 %v1827
        %1867 = vmatprep.subr.mxu0 0.0
        %1868 = vmatpush1.msra.mxu0 %v1826
        %1869 = vmatprep.subr.mxu0 0.0
        %1870 = vmatpush1.msra.mxu0 %v1825
        %1871 = vmatprep.subr.mxu0 0.0
        %1872 = vmatpush1.msra.mxu0 %v1824
        %1873 = vmatprep.subr.mxu0 0.0
        %1874 = vmatpush2.msra.mxu0 0.0
        %1875 = vmatprep.subr.mxu0 0.0
        %1876 = vmatpush2.msra.mxu0 0.0
        %1877 = vmatprep.subr.mxu0 0.0
        %1878 = vmatpush2.msra.mxu0 0.0
        %1879 = vmatprep.subr.mxu0 0.0
        %1880 = vmatpush2.msra.mxu0 0.0
        %1881 = vmatprep.subr.mxu0 0.0
        %1882 = vmatpush2.msra.mxu0 0.0
        %1883 = vmatprep.subr.mxu0 0.0
        %1884 = vmatpush2.msra.mxu0 0.0
        %1885 = vmatprep.subr.mxu0 0.0
        %1886 = vmatpush2.msra.mxu0 0.0
        %1887 = vmatprep.subr.mxu0 0.0
        %1888 = vmatpush2.msra.mxu0 0.0
        %1889 = vmatprep.subr.mxu0 0.0
        %1890 = vmatpush2.msra.mxu0 0.0
        %1891 = vmatprep.subr.mxu0 0.0
        %1892 = vmatpush2.msra.mxu0 0.0
        %1893 = vmatprep.subr.mxu0 0.0
        %1894 = vmatpush2.msra.mxu0 0.0
        %1895 = vmatprep.subr.mxu0 0.0
        %1896 = vmatpush2.msra.mxu0 0.0
        %1897 = vmatprep.subr.mxu0 0.0
        %1898 = vmatpush2.msra.mxu0 0.0
        %1899 = vmatprep.subr.mxu0 0.0
        %1900 = vmatpush2.msra.mxu0 0.0
        %1901 = vmatprep.subr.mxu0 0.0
        %1902 = vmatpush2.msra.mxu0 0.0
        %1903 = vmatprep.subr.mxu0 0.0
        %1904 = vmatpush2.msra.mxu0 0.0
        %1905 = vmatprep.mubr.f32.mxu0 0.0
        %1906 = vmatmul.mubr.f32.gmra.mxu0 %v1836
        %v1907 = vpop.f32.mrf.mxu0
        %v1908 = vadd.f32 %v1833, %v1907
        %v1909 = vpop.f32.mrf.mxu0
        %1910 = vmatprep.mubr.f32.mxu0 0.0
        %1911 = vmatmul.mubr.f32.gmra.mxu0 %v1839
        %v1912 = vpop.f32.mrf.mxu0
        %v1913 = vadd.f32 %v1833, %v1912
        %v1914 = vpop.f32.mrf.mxu0
        %1915 = vdwg.mxu0
        %v1916 = vmul.f32 %v1908, %v1908
        %v1917 = vmul.f32 %v1913, %v1913
        %v1918 = vmul.f32 %v1908, %v1916
        %v1919 = vmul.f32 %v1913, %v1917
        %v1920 = vmul.f32 %v1918, 0.044715
        %v1921 = vmul.f32 %v1919, 0.044715
        %v1922 = vadd.f32 %v1908, %v1920
        %v1923 = vadd.f32 %v1913, %v1921
        %v1924 = vmul.f32 %v1922, 0.7978846
        %v1925 = vmul.f32 %v1923, 0.7978846
        %v1926 = vtanh.pop %v1924
        %v1927 = vtanh.pop %v1925
        %v1928 = vadd.f32 %v1926, 1.0
        %v1929 = vadd.f32 %v1927, 1.0
        %v1930 = vmul.f32 %v1928, 0.5
        %v1931 = vmul.f32 %v1929, 0.5
        %v1932 = vmul.f32 %v1908, %v1930
        %v1933 = vmul.f32 %v1913, %v1931
        %v1934 = vld [vmem:[%s841] sm:$0xff]
        %v1935 = vld [vmem:[%s841 + $0x8] sm:$0xff]
        %v1936 = vld [vmem:[%s841 + $0x10] sm:$0xff]
        %v1937 = vld [vmem:[%s841 + $0x18] sm:$0xff]
        %v1938 = vld [vmem:[%s841 + $0x20] sm:$0xff]
        %v1939 = vld [vmem:[%s841 + $0x28] sm:$0xff]
        %v1940 = vld [vmem:[%s841 + $0x30] sm:$0xff]
        %v1941 = vld [vmem:[%s841 + $0x38] sm:$0xff]
        %v1942 = vld [vmem:[%s715] sm:$0x1]
        %v1944 = vlaneseq
        %v1945 = vshrl.u32 %v1944, 7
        %v1946 = vsub.s32 0, %v1945
        %v1947 = vrot.slane %v1942, %v1946
        %vm1949 = vcmask 523264
        %v1951 = vsel %vm1949, %v1932, 0
        %v1954 = vsel %vm1949, %v1933, 0
        %1956 = vmatprep.subr.mxu0 0.0
        %1957 = vmatpush1.msra.mxu0 0.0
        %1958 = vmatprep.subr.mxu0 0.0
        %1959 = vmatpush1.msra.mxu0 0.0
        %1960 = vmatprep.subr.mxu0 0.0
        %1961 = vmatpush1.msra.mxu0 0.0
        %1962 = vmatprep.subr.mxu0 0.0
        %1963 = vmatpush1.msra.mxu0 0.0
        %1964 = vmatprep.subr.mxu0 0.0
        %1965 = vmatpush1.msra.mxu0 0.0
        %1966 = vmatprep.subr.mxu0 0.0
        %1967 = vmatpush1.msra.mxu0 0.0
        %1968 = vmatprep.subr.mxu0 0.0
        %1969 = vmatpush1.msra.mxu0 0.0
        %1970 = vmatprep.subr.mxu0 0.0
        %1971 = vmatpush1.msra.mxu0 0.0
        %1972 = vmatprep.subr.mxu0 0.0
        %1973 = vmatpush1.msra.mxu0 %v1941
        %1974 = vmatprep.subr.mxu0 0.0
        %1975 = vmatpush1.msra.mxu0 %v1940
        %1976 = vmatprep.subr.mxu0 0.0
        %1977 = vmatpush1.msra.mxu0 %v1939
        %1978 = vmatprep.subr.mxu0 0.0
        %1979 = vmatpush1.msra.mxu0 %v1938
        %1980 = vmatprep.subr.mxu0 0.0
        %1981 = vmatpush1.msra.mxu0 %v1937
        %1982 = vmatprep.subr.mxu0 0.0
        %1983 = vmatpush1.msra.mxu0 %v1936
        %1984 = vmatprep.subr.mxu0 0.0
        %1985 = vmatpush1.msra.mxu0 %v1935
        %1986 = vmatprep.subr.mxu0 0.0
        %1987 = vmatpush1.msra.mxu0 %v1934
        %1988 = vmatprep.subr.mxu0 0.0
        %1989 = vmatpush2.msra.mxu0 0.0
        %1990 = vmatprep.subr.mxu0 0.0
        %1991 = vmatpush2.msra.mxu0 0.0
        %1992 = vmatprep.subr.mxu0 0.0
        %1993 = vmatpush2.msra.mxu0 0.0
        %1994 = vmatprep.subr.mxu0 0.0
        %1995 = vmatpush2.msra.mxu0 0.0
        %1996 = vmatprep.subr.mxu0 0.0
        %1997 = vmatpush2.msra.mxu0 0.0
        %1998 = vmatprep.subr.mxu0 0.0
        %1999 = vmatpush2.msra.mxu0 0.0
        %2000 = vmatprep.subr.mxu0 0.0
        %2001 = vmatpush2.msra.mxu0 0.0
        %2002 = vmatprep.subr.mxu0 0.0
        %2003 = vmatpush2.msra.mxu0 0.0
        %2004 = vmatprep.subr.mxu0 0.0
        %2005 = vmatpush2.msra.mxu0 0.0
        %2006 = vmatprep.subr.mxu0 0.0
        %2007 = vmatpush2.msra.mxu0 0.0
        %2008 = vmatprep.subr.mxu0 0.0
        %2009 = vmatpush2.msra.mxu0 0.0
        %2010 = vmatprep.subr.mxu0 0.0
        %2011 = vmatpush2.msra.mxu0 0.0
        %2012 = vmatprep.subr.mxu0 0.0
        %2013 = vmatpush2.msra.mxu0 0.0
        %2014 = vmatprep.subr.mxu0 0.0
        %2015 = vmatpush2.msra.mxu0 0.0
        %2016 = vmatprep.subr.mxu0 0.0
        %2017 = vmatpush2.msra.mxu0 0.0
        %2018 = vmatprep.subr.mxu0 0.0
        %2019 = vmatpush2.msra.mxu0 0.0
        %2020 = vmatprep.mubr.f32.mxu0 0.0
        %2021 = vmatmul.mubr.f32.gmra.mxu0 %v1951
        %v2022 = vpop.f32.mrf.mxu0
        %v2023 = vadd.f32 %v1947, %v2022
        %v2024 = vpop.f32.mrf.mxu0
        %2025 = vmatprep.mubr.f32.mxu0 0.0
        %2026 = vmatmul.mubr.f32.gmra.mxu0 %v1954
        %v2027 = vpop.f32.mrf.mxu0
        %v2028 = vadd.f32 %v1947, %v2027
        %v2029 = vpop.f32.mrf.mxu0
        %2030 = vdwg.mxu0
        %v2031 = vadd.f32 %v1822, %v2023
        %v2032 = vadd.f32 %v1823, %v2028
        %v2033 = vld [vmem:[%s723] sm:$0x1]
        %v2034 = vld [vmem:[%s731] sm:$0x1]
        %v2035 = vsel %vm912, %v2031, 0.0
        %2036 = vadd.xlane.f32.xlu0 %v2035
        %v2037 = vpop.xlane.xlu0 %2036
        %v2038 = vsel %vm912, %v2032, 0.0
        %2039 = vadd.xlane.f32.xlu0 %v2038
        %v2040 = vpop.xlane.xlu0 %2039
        %v2041 = vmul.f32 %v2037, %v1787
        %v2042 = vmul.f32 %v2040, %v1787
        %v2043 = vsub.f32 %v2031, %v2041
        %v2044 = vsub.f32 %v2032, %v2042
        %v2045 = vmul.f32 %v2043, %v2043
        %v2046 = vmul.f32 %v2044, %v2044
        %v2047 = vsel %vm912, %v2045, 0.0
        %2048 = vadd.xlane.f32.xlu0 %v2047
        %v2049 = vpop.xlane.xlu0 %2048
        %v2050 = vsel %vm912, %v2046, 0.0
        %2051 = vadd.xlane.f32.xlu0 %v2050
        %v2052 = vpop.xlane.xlu0 %2051
        %v2053 = vmul.f32 %v2049, %v1787
        %v2054 = vmul.f32 %v2052, %v1787
        %v2055 = vadd.f32 %v2053, 1e-12
        %v2056 = vadd.f32 %v2054, 1e-12
        %v2057 = vrsqrt.pop %v2055
        %v2058 = vrsqrt.pop %v2056
        %v2059 = vmul.f32 %v2043, %v2057
        %v2060 = vmul.f32 %v2044, %v2058
        %v2062 = vlaneseq
        %v2063 = vshrl.u32 %v2062, 7
        %v2064 = vsub.s32 0, %v2063
        %v2065 = vrot.slane %v2033, %v2064
        %v2067 = vmul.f32 %v2059, %v2065
        %v2068 = vmul.f32 %v2060, %v2065
        %v2070 = vlaneseq
        %v2071 = vshrl.u32 %v2070, 7
        %v2072 = vsub.s32 0, %v2071
        %v2073 = vrot.slane %v2034, %v2072
        %v2075 = vadd.f32 %v2067, %v2073
        %v2076 = vadd.f32 %v2068, %v2073
        %2077 = vst.msk [vmem:[#allocation2] sm:$0xff] %vm912, %v2075
        %2078 = vst.msk [vmem:[#allocation2 + $0x8] sm:$0xff] %vm912, %v2076
        %p2079 = scmp.ge.s32.totalorder %s30, 8
        // Predicated region
        $region129: #{bert_embedding_forward.1} parent=83 // pred_check
          %p2080 = pneg %p2079
        $region130: #{bert_embedding_forward.1} parent=83 // pred_check_branch
          %2082 = sbr.rel (%p2080) target = $region132
        $region131: #{bert_embedding_forward.1} parent=83 // pred_region
          %v2083 = vsel %vm912, %v2075, 0.0
          %v2084 = vrot.slane %v2083, 4
          %v2085 = vadd.f32 %v2083, %v2084
          %v2086 = vrot.slane %v2085, 2
          %v2087 = vadd.f32 %v2085, %v2086
          %v2088 = vrot.slane %v2087, 1
          %v2089 = vadd.f32 %v2087, %v2088
          %v2090 = vsel %vm912, %v2076, 0.0
          %v2091 = vrot.slane %v2090, 4
          %v2092 = vadd.f32 %v2090, %v2091
          %v2093 = vrot.slane %v2092, 2
          %v2094 = vadd.f32 %v2092, %v2093
          %v2095 = vrot.slane %v2094, 1
          %v2096 = vadd.f32 %v2094, %v2095
          %v2097 = vld [vmem:[#allocation17] sm:$0x3]
          %vm2098 = vcmask 1040384
          %v2099 = vsel %vm2098, %v2089, %v2096
          %v2100 = vadd.f32 %v2097, %v2099
          %vm2101 = vcmask 254976
          %2102 = vst.msk [vmem:[#allocation17] sm:$0x3] %vm2101, %v2100
        $region132: #{bert_embedding_forward.1} parent=83 // pred_fallthru
          _
        %p2103 = scmp.eq.s32.totalorder %s30, 11
        // Predicated region
        $region133: #{bert_embedding_forward.1} parent=83 // pred_check
          %p2104 = pneg %p2103
        $region134: #{bert_embedding_forward.1} parent=83 // pred_check_branch
          %2106 = sbr.rel (%p2104) target = $region136
        $region135: #{bert_embedding_forward.1} parent=83 // pred_region
          %v2107 = vld [vmem:[#allocation17] sm:$0x3]
          %v2108 = vmul.f32 %v2107, 0.03125
          %vm2109 = vcmask 254976
          %2110 = vst.msk [vmem:[#allocation17] sm:$0x3] %vm2109, %v2108
        $region136: #{bert_embedding_forward.1} parent=83 // pred_fallthru
          _
        // Predicated region
        $region137: #{bert_embedding_forward.1} parent=83 // pred_check
          %p2111 = pneg %p439
        $region138: #{bert_embedding_forward.1} parent=83 // pred_check_branch
          %2113 = sbr.rel (%p2111) target = $region140
        $region139: #{bert_embedding_forward.1} parent=83 // pred_region
          %s2115 = ssub.s32 32, 32
          %2116 = vsyncadd [#allocation6], %s2115
          %s2118 = sshll.u32 [#allocation17], 4
          %s2119 = int_to_ptr.vmem [resolvable:$true] %s2118
          %2121 = dma.vmem_to_hbm [thread:$0]  %s2119, 32, %s16, [#allocation6]
        $region140: #{bert_embedding_forward.1} parent=83 // pred_fallthru
          _
        // Predicated region
        $region141: #{bert_embedding_forward.1} parent=83 // pred_check
          %p2122 = pneg %p439
        $region142: #{bert_embedding_forward.1} parent=83 // pred_check_branch
          %2124 = sbr.rel (%p2122) target = $region144
        $region143: #{bert_embedding_forward.1} parent=83 // pred_region
          %2125 = dma.done [#allocation6], 32
        $region144: #{bert_embedding_forward.1} parent=83 // pred_fallthru
          _
      $region84: #{bert_embedding_forward.1} parent=5 // pred_fallthru
        _
      %p2126 = scmp.le.s32.totalorder 2, %s25
      // Predicated region
      $region145: #{bert_embedding_forward.1} parent=5 // pred_check
        %p2127 = pneg %p2126
      $region146: #{bert_embedding_forward.1} parent=5 // pred_check_branch
        %2129 = sbr.rel (%p2127) target = $region148
      $region147: #{bert_embedding_forward.1} parent=5 // pred_region
        %s2130 = ssub.s32 %s25, 2
      $region148: #{bert_embedding_forward.1} parent=5 // pred_fallthru
        _
    $region6: #{bert_embedding_forward.1} parent=1 // loop_footer
      %s29 = sadd.s32 1, %s25
    $region7: #{bert_embedding_forward.1} parent=1 // loop_footer_branch
      %24 = sbr.rel target = $region3
    $region8: #{bert_embedding_forward.1} parent=1 // loop_exit
      _
    %2131 = vsyncpa [#allocation5], 1
    %s2132 = scalar_lea.sflag [#allocation5], 1
    %2133 = vsyncpa %s2132, 1
    %2134 = vsyncpa [#allocation8], 1
    %2135 = vsyncpa [#allocation6], 1
    %s2136 = scalar_lea.sflag [#allocation6], 1
    %2137 = vsyncpa %s2136, 1

</llo_original>
